<compile_context>
chip_gen: v5e
topology: v5e:2x2
jax: 0.10.0
libtpu: 0.0.40
codegen_flags: <defaults>
</compile_context>

<pallas_src>
import functools

import jax
import jax.numpy as jnp
import numpy as np
from jax.experimental import pallas as pl
from jax.experimental.pallas import tpu as pltpu

EPS = 1e-5  # nn.BatchNorm2d default


# ----------------------------------------------------------------------------
# Kernel 1: ConvTranspose2d(kernel=2, stride=2) as one lane-dense matmul.
#   x_ref    : (N*H1, W1*C1)      input rows, channels packed on lanes
#   bmat_ref : (W1*C1, 2*W*Cmid)  expanded transpose-conv weights
#   bias_ref : (1, 2*W*Cmid)      bias tiled over (dh, w)
#   o_ref    : (N*H1, 2*W*Cmid)   packed as [dh, w, c]; a row-major reshape in
#                                 the wrapper gives (N, 2*H1, W*Cmid).
# ----------------------------------------------------------------------------
def upsample_kernel(x_ref, bmat_ref, bias_ref, o_ref):
    o_ref[...] = (
        jnp.dot(x_ref[...], bmat_ref[...], preferred_element_type=jnp.float32)
        + bias_ref[...]
    )


# ----------------------------------------------------------------------------
# Kernel 2: fused DoubleConv = (conv3x3 + BN(batch stats) + ReLU) x 2.
# Whole batch per invocation; all intermediates stay in VMEM.
# ----------------------------------------------------------------------------
def double_conv_kernel(up_ref, x2_ref, b1u_ref, b1x_ref, b2_ref,
                       g1_ref, bt1_ref, g2_ref, bt2_ref, avg_ref,
                       o_ref, pad1u, pad1x, yscr, pad2, *, inv_count):
    N, H, L = o_ref.shape  # L = W * Cout  (lane-dense, 128 at the test shapes)

    def banded_conv(sources):
        # 3x3 conv as 3 banded matmuls per input block: the kw taps and input
        # channels live in the contraction dim -> no per-tap slice+reshape
        # relayouts, only static sublane-offset row windows.
        for n in range(N):
            acc = jnp.zeros((H, L), jnp.float32)
            for src, bmat in sources:
                for kh in range(3):
                    acc = acc + jnp.dot(src[n, kh:kh + H, :], bmat[kh],
                                        preferred_element_type=jnp.float32)
            yscr[n] = acc

    def bn_relu(g_ref, bt_ref):
        # Train-mode BatchNorm over the whole batch held in VMEM. Two-pass
        # (mean first, then E[(y-mean)^2]) for numerical safety. The channel
        # reduction / broadcast across the packed (w, c) lane axis is done with
        # one (1,L)x(L,L) matmul against a constant channel-selector matrix.
        y = yscr[...]                                                   # (N,H,L)
        lane_sum = jnp.sum(jnp.sum(y, axis=0), axis=0, keepdims=True)   # (1, L)
        mean = jnp.dot(lane_sum, avg_ref[...],
                       preferred_element_type=jnp.float32) * inv_count
        centered = y - mean
        lane_ss = jnp.sum(jnp.sum(centered * centered, axis=0), axis=0,
                          keepdims=True)
        var = jnp.dot(lane_ss, avg_ref[...],
                      preferred_element_type=jnp.float32) * inv_count
        scale = g_ref[...] * jax.lax.rsqrt(var + EPS)
        return jnp.maximum(centered * scale + bt_ref[...], 0.0)

    # ---- conv1 (on concat(up(x1), x2), split into two weight blocks) ----
    pad1u[...] = jnp.zeros_like(pad1u)   # only the halo rows truly need zeros
    pad1x[...] = jnp.zeros_like(pad1x)
    pad1u[:, 1:H + 1, :] = up_ref[...]   # upsampled-x1 channel block
    pad1x[:, 1:H + 1, :] = x2_ref[...]   # skip-connection channel block
    banded_conv([(pad1u, b1u_ref), (pad1x, b1x_ref)])
    r1 = bn_relu(g1_ref, bt1_ref)

    # ---- conv2 ----
    pad2[...] = jnp.zeros_like(pad2)
    pad2[:, 1:H + 1, :] = r1
    banded_conv([(pad2, b2_ref)])
    o_ref[...] = bn_relu(g2_ref, bt2_ref)


# ----------------------------------------------------------------------------
# Wrapper glue: layout transforms and one-time weight preprocessing.
# ----------------------------------------------------------------------------
def _banded_conv_weights(w_part, W):
    """PyTorch (Cout, Cin, 3, 3) conv weights -> (3, W*Cin, W*Cout) band matrices.

    For each kh: y[h, jo*Cout+co] += sum_{ji,ci} row[h+kh-1][ji*Cin+ci] *
    B[kh][ji*Cin+ci, jo*Cout+co] reproduces Conv2d(k=3, padding=1) along W
    (missing border columns have no band entry == zero padding)."""
    Cout, Cin = w_part.shape[0], w_part.shape[1]
    band = np.zeros((3, W, W), np.float32)
    for kw in range(3):
        for jo in range(W):
            ji = jo + kw - 1
            if 0 <= ji < W:
                band[kw, ji, jo] = 1.0
    B = jnp.einsum('apw,oiha->hpiwo', jnp.asarray(band), w_part)
    return B.reshape(3, W * Cin, W * Cout)


def _upsample_weights(wup, W1):
    """ConvTranspose2d(k=2,s=2) weights (C1, Cmid, 2, 2) -> (W1*C1, 2*W*Cmid)."""
    C1, Cmid = wup.shape[0], wup.shape[1]
    W = 2 * W1
    scat = np.zeros((2, W1, W), np.float32)
    for dw in range(2):
        scat[dw, np.arange(W1), 2 * np.arange(W1) + dw] = 1.0
    B = jnp.einsum('djw,cohd->jchwo', jnp.asarray(scat), wup)
    return B.reshape(W1 * C1, 2 * W * Cmid)


@jax.jit
def up_forward(x1, x2, wup, bup, w1, b1, w2, b2, g1, bt1, g2, bt2):
    """Up.forward(x1, x2) with train-mode BatchNorm statistics."""
    del b1, b2  # conv biases cancel exactly under batch-stat BatchNorm
    N, C1, H1, W1 = x1.shape
    Cmid = wup.shape[1]
    _, C2, H, W = x2.shape
    Cout = w1.shape[0]
    assert H == 2 * H1 and W == 2 * W1 and w1.shape[1] == Cmid + C2

    # ---- Pass 1: ConvTranspose2d upsample (Pallas, single matmul) ----
    x1_rows = jnp.transpose(x1, (0, 2, 3, 1)).reshape(N * H1, W1 * C1)
    bmat_up = _upsample_weights(wup, W1)
    bias_up = jnp.tile(bup, 2 * W).reshape(1, 2 * W * Cmid)

    up_packed = pl.pallas_call(
        upsample_kernel,
        out_shape=jax.ShapeDtypeStruct((N * H1, 2 * W * Cmid), jnp.float32),
    )(x1_rows, bmat_up, bias_up)
    # depth-to-space is a free row-major reshape: (n*H1, [dh,w,c]) -> (n, 2*H1, w*c)
    up_rows = up_packed.reshape(N, H, W * Cmid)

    # ---- Pass 2: fused DoubleConv (Pallas, whole batch, no HBM intermediates) ----
    x2_rows = jnp.transpose(x2, (0, 2, 3, 1)).reshape(N, H, W * C2)

    B1u = _banded_conv_weights(w1[:, :Cmid], W)   # (3, W*Cmid, W*Cout)
    B1x = _banded_conv_weights(w1[:, Cmid:], W)   # (3, W*C2,   W*Cout)
    B2 = _banded_conv_weights(w2, W)              # (3, W*Cout, W*Cout)

    lane = np.arange(W * Cout)
    chan_avg = jnp.asarray(
        (lane[:, None] % Cout == lane[None, :] % Cout).astype(np.float32))

    g1r = jnp.tile(g1, W).reshape(1, W * Cout)
    bt1r = jnp.tile(bt1, W).reshape(1, W * Cout)
    g2r = jnp.tile(g2, W).reshape(1, W * Cout)
    bt2r = jnp.tile(bt2, W).reshape(1, W * Cout)

    kernel = functools.partial(double_conv_kernel,
                               inv_count=1.0 / float(N * H * W))
    out_packed = pl.pallas_call(
        kernel,
        out_shape=jax.ShapeDtypeStruct((N, H, W * Cout), jnp.float32),
        scratch_shapes=[
            pltpu.VMEM((N, H + 2, W * Cmid), jnp.float32),  # conv1 padded (up)
            pltpu.VMEM((N, H + 2, W * C2), jnp.float32),    # conv1 padded (x2)
            pltpu.VMEM((N, H, W * Cout), jnp.float32),      # conv output / BN in
            pltpu.VMEM((N, H + 2, W * Cout), jnp.float32),  # conv2 padded input
        ],
    )(up_rows, x2_rows, B1u, B1x, B2, g1r, bt1r, g2r, bt2r, chan_avg)

    return jnp.transpose(out_packed.reshape(N, H, W, Cout), (0, 3, 1, 2))


# ----------------------------------------------------------------------------
# Pure-JAX reference (faithful to the PyTorch module, incl. conv biases).
# ----------------------------------------------------------------------------
def _conv_bn_relu_ref(x_nhwc, w_oihw, b, gamma, beta):
    w_hwio = jnp.transpose(w_oihw, (2, 3, 1, 0))
    y = jax.lax.conv_general_dilated(
        x_nhwc, w_hwio, window_strides=(1, 1), padding="SAME",
        dimension_numbers=("NHWC", "HWIO", "NHWC"))
    y = y + b
    mean = jnp.mean(y, axis=(0, 1, 2))
    var = jnp.mean((y - mean) ** 2, axis=(0, 1, 2))
    y = (y - mean) * jax.lax.rsqrt(var + EPS) * gamma + beta
    return jnp.maximum(y, 0.0)


def reference_forward(x1, x2, wup, bup, w1, b1, w2, b2, g1, bt1, g2, bt2):
    N, C1, H1, W1 = x1.shape
    Cmid = wup.shape[1]
    up = jnp.einsum('ncij,cohd->nihjdo', x1, wup).reshape(
        N, 2 * H1, 2 * W1, Cmid) + bup
    cat = jnp.concatenate([up, jnp.transpose(x2, (0, 2, 3, 1))], axis=-1)
    h = _conv_bn_relu_ref(cat, w1, b1, g1, bt1)
    h = _conv_bn_relu_ref(h, w2, b2, g2, bt2)
    return jnp.transpose(h, (0, 3, 1, 2))


if __name__ == "__main__":
    N = 2
    Cin = 4            # Up(in_channels=4, out_channels=8)
    Cout = 8
    H1 = W1 = 8        # x1 is the low-res map; x2 is the 16x16 skip connection
    Cmid = Cin // 2    # ConvTranspose2d output channels
    C2 = Cin // 2      # skip channels -> concat has Cin channels
    H, W = 2 * H1, 2 * W1

    key = jax.random.PRNGKey(0)
    ks = jax.random.split(key, 8)
    x1 = jax.random.normal(ks[0], (N, Cin, H1, W1), jnp.float32)
    x2 = jax.random.normal(ks[1], (N, C2, H, W), jnp.float32)

    bnd_up = 1.0 / np.sqrt(Cin * 2 * 2)
    wup = jax.random.uniform(ks[2], (Cin, Cmid, 2, 2), jnp.float32, -bnd_up, bnd_up)
    bup = jax.random.uniform(ks[3], (Cmid,), jnp.float32, -bnd_up, bnd_up)
    bnd1 = 1.0 / np.sqrt(Cin * 9)
    w1 = jax.random.uniform(ks[4], (Cout, Cin, 3, 3), jnp.float32, -bnd1, bnd1)
    b1 = jax.random.uniform(ks[5], (Cout,), jnp.float32, -bnd1, bnd1)
    bnd2 = 1.0 / np.sqrt(Cout * 9)
    w2 = jax.random.uniform(ks[6], (Cout, Cout, 3, 3), jnp.float32, -bnd2, bnd2)
    b2 = jax.random.uniform(ks[7], (Cout,), jnp.float32, -bnd2, bnd2)
    g1 = jnp.ones((Cout,), jnp.float32)    # BatchNorm2d default weight
    bt1 = jnp.zeros((Cout,), jnp.float32)  # BatchNorm2d default bias
    g2 = jnp.ones((Cout,), jnp.float32)
    bt2 = jnp.zeros((Cout,), jnp.float32)

    out = jax.block_until_ready(
        up_forward(x1, x2, wup, bup, w1, b1, w2, b2, g1, bt1, g2, bt2))
    ref = jax.block_until_ready(
        reference_forward(x1, x2, wup, bup, w1, b1, w2, b2, g1, bt1, g2, bt2))

    assert out.shape == (N, Cout, H, W), out.shape
    max_err = float(jnp.max(jnp.abs(out - ref)))
    assert jnp.allclose(out, ref, atol=1e-4, rtol=1e-4), max_err
    print("KERNEL_OK")
</pallas_src>

<mosaic_0001>
module attributes {stable_mosaic.version = 11 : i64} {
  func.func @upsample_kernel(%arg0: memref<16x32xf32, #tpu.memory_space<vmem>>, %arg1: memref<32x64xf32, #tpu.memory_space<vmem>>, %arg2: memref<1x64xf32, #tpu.memory_space<vmem>>, %arg3: memref<16x64xf32, #tpu.memory_space<vmem>>) attributes {dimension_semantics = [], scalar_prefetch = 0 : i64, scratch_operands = 0 : i64, tpu.core_type = #tpu.core_type<tc>} {
    %c0 = arith.constant 0 : index
    %c0_0 = arith.constant 0 : index
    %0 = vector.load %arg0[%c0, %c0_0] : memref<16x32xf32, #tpu.memory_space<vmem>>, vector<16x32xf32>
    %c0_1 = arith.constant 0 : index
    %c0_2 = arith.constant 0 : index
    %1 = vector.load %arg1[%c0_1, %c0_2] : memref<32x64xf32, #tpu.memory_space<vmem>>, vector<32x64xf32>
    %cst = arith.constant dense<0.000000e+00> : vector<16x64xf32>
    %2 = tpu.matmul %0, %1, %cst {dimension_numbers = #tpu.dot_dimension_numbers<[1], [0], [0], [1], [0, 0, 1, 1], [], []>} : vector<16x32xf32>, vector<32x64xf32>, vector<16x64xf32> -> vector<16x64xf32>
    %c0_3 = arith.constant 0 : index
    %c0_4 = arith.constant 0 : index
    %3 = vector.load %arg2[%c0_3, %c0_4] : memref<1x64xf32, #tpu.memory_space<vmem>>, vector<1x64xf32>
    %4 = vector.broadcast %3 : vector<1x64xf32> to vector<16x64xf32>
    %5 = arith.addf %2, %4 : vector<16x64xf32>
    %c0_5 = arith.constant 0 : index
    %c0_6 = arith.constant 0 : index
    %6 = vector.load %arg3[%c0_5, %c0_6] : memref<16x64xf32, #tpu.memory_space<vmem>>, vector<16x64xf32>
    tpu.vector_store %arg3[%c0_5, %c0_6], %5 {strides = array<i32>} : memref<16x64xf32, #tpu.memory_space<vmem>>, vector<16x64xf32>,
    return
  }
}

module attributes {stable_mosaic.version = 11 : i64} {
  func.func @double_conv_kernel(%arg0: memref<2x16x32xf32, #tpu.memory_space<vmem>>, %arg1: memref<2x16x32xf32, #tpu.memory_space<vmem>>, %arg2: memref<3x32x128xf32, #tpu.memory_space<vmem>>, %arg3: memref<3x32x128xf32, #tpu.memory_space<vmem>>, %arg4: memref<3x128x128xf32, #tpu.memory_space<vmem>>, %arg5: memref<1x128xf32, #tpu.memory_space<vmem>>, %arg6: memref<1x128xf32, #tpu.memory_space<vmem>>, %arg7: memref<1x128xf32, #tpu.memory_space<vmem>>, %arg8: memref<1x128xf32, #tpu.memory_space<vmem>>, %arg9: memref<128x128xf32, #tpu.memory_space<vmem>>, %arg10: memref<2x16x128xf32, #tpu.memory_space<vmem>>, %arg11: memref<2x18x32xf32, #tpu.memory_space<vmem>>, %arg12: memref<2x18x32xf32, #tpu.memory_space<vmem>>, %arg13: memref<2x16x128xf32, #tpu.memory_space<vmem>>, %arg14: memref<2x18x128xf32, #tpu.memory_space<vmem>>) attributes {dimension_semantics = [], scalar_prefetch = 0 : i64, scratch_operands = 4 : i64, tpu.core_type = #tpu.core_type<tc>} {
    %cst = arith.constant 0.000000e+00 : f32
    %0 = vector.broadcast %cst : f32 to vector<2x18x32xf32>
    %c0 = arith.constant 0 : index
    %c0_0 = arith.constant 0 : index
    %c0_1 = arith.constant 0 : index
    %1 = vector.load %arg11[%c0, %c0_0, %c0_1] : memref<2x18x32xf32, #tpu.memory_space<vmem>>, vector<2x18x32xf32>
    tpu.vector_store %arg11[%c0, %c0_0, %c0_1], %0 {strides = array<i32>} : memref<2x18x32xf32, #tpu.memory_space<vmem>>, vector<2x18x32xf32>,
    %cst_2 = arith.constant 0.000000e+00 : f32
    %2 = vector.broadcast %cst_2 : f32 to vector<2x18x32xf32>
    %c0_3 = arith.constant 0 : index
    %c0_4 = arith.constant 0 : index
    %c0_5 = arith.constant 0 : index
    %3 = vector.load %arg12[%c0_3, %c0_4, %c0_5] : memref<2x18x32xf32, #tpu.memory_space<vmem>>, vector<2x18x32xf32>
    tpu.vector_store %arg12[%c0_3, %c0_4, %c0_5], %2 {strides = array<i32>} : memref<2x18x32xf32, #tpu.memory_space<vmem>>, vector<2x18x32xf32>,
    %c0_6 = arith.constant 0 : index
    %c0_7 = arith.constant 0 : index
    %c0_8 = arith.constant 0 : index
    %4 = vector.load %arg0[%c0_6, %c0_7, %c0_8] : memref<2x16x32xf32, #tpu.memory_space<vmem>>, vector<2x16x32xf32>
    %c0_9 = arith.constant 0 : index
    %c1 = arith.constant 1 : index
    %c0_10 = arith.constant 0 : index
    %5 = vector.load %arg11[%c0_9, %c1, %c0_10] : memref<2x18x32xf32, #tpu.memory_space<vmem>>, vector<2x16x32xf32>
    tpu.vector_store %arg11[%c0_9, %c1, %c0_10], %4 {strides = array<i32>} : memref<2x18x32xf32, #tpu.memory_space<vmem>>, vector<2x16x32xf32>,
    %c0_11 = arith.constant 0 : index
    %c0_12 = arith.constant 0 : index
    %c0_13 = arith.constant 0 : index
    %6 = vector.load %arg1[%c0_11, %c0_12, %c0_13] : memref<2x16x32xf32, #tpu.memory_space<vmem>>, vector<2x16x32xf32>
    %c0_14 = arith.constant 0 : index
    %c1_15 = arith.constant 1 : index
    %c0_16 = arith.constant 0 : index
    %7 = vector.load %arg12[%c0_14, %c1_15, %c0_16] : memref<2x18x32xf32, #tpu.memory_space<vmem>>, vector<2x16x32xf32>
    tpu.vector_store %arg12[%c0_14, %c1_15, %c0_16], %6 {strides = array<i32>} : memref<2x18x32xf32, #tpu.memory_space<vmem>>, vector<2x16x32xf32>,
    %cst_17 = arith.constant 0.000000e+00 : f32
    %8 = vector.broadcast %cst_17 : f32 to vector<16x128xf32>
    %c0_18 = arith.constant 0 : index
    %c0_19 = arith.constant 0 : index
    %c0_20 = arith.constant 0 : index
    %9 = vector.load %arg11[%c0_18, %c0_19, %c0_20] : memref<2x18x32xf32, #tpu.memory_space<vmem>>, vector<1x16x32xf32>
    %10 = vector.shape_cast %9 : vector<1x16x32xf32> to vector<16x32xf32>
    %c0_21 = arith.constant 0 : index
    %c0_22 = arith.constant 0 : index
    %c0_23 = arith.constant 0 : index
    %11 = vector.load %arg2[%c0_21, %c0_22, %c0_23] : memref<3x32x128xf32, #tpu.memory_space<vmem>>, vector<1x32x128xf32>
    %12 = vector.shape_cast %11 : vector<1x32x128xf32> to vector<32x128xf32>
    %cst_24 = arith.constant dense<0.000000e+00> : vector<16x128xf32>
    %13 = tpu.matmul %10, %12, %cst_24 {dimension_numbers = #tpu.dot_dimension_numbers<[1], [0], [0], [1], [0, 0, 1, 1], [], []>} : vector<16x32xf32>, vector<32x128xf32>, vector<16x128xf32> -> vector<16x128xf32>
    %14 = arith.addf %8, %13 : vector<16x128xf32>
    %c0_25 = arith.constant 0 : index
    %c1_26 = arith.constant 1 : index
    %c0_27 = arith.constant 0 : index
    %15 = vector.load %arg11[%c0_25, %c1_26, %c0_27] : memref<2x18x32xf32, #tpu.memory_space<vmem>>, vector<1x16x32xf32>
    %16 = vector.shape_cast %15 : vector<1x16x32xf32> to vector<16x32xf32>
    %c1_28 = arith.constant 1 : index
    %c0_29 = arith.constant 0 : index
    %c0_30 = arith.constant 0 : index
    %17 = vector.load %arg2[%c1_28, %c0_29, %c0_30] : memref<3x32x128xf32, #tpu.memory_space<vmem>>, vector<1x32x128xf32>
    %18 = vector.shape_cast %17 : vector<1x32x128xf32> to vector<32x128xf32>
    %cst_31 = arith.constant dense<0.000000e+00> : vector<16x128xf32>
    %19 = tpu.matmul %16, %18, %cst_31 {dimension_numbers = #tpu.dot_dimension_numbers<[1], [0], [0], [1], [0, 0, 1, 1], [], []>} : vector<16x32xf32>, vector<32x128xf32>, vector<16x128xf32> -> vector<16x128xf32>
    %20 = arith.addf %14, %19 : vector<16x128xf32>
    %c0_32 = arith.constant 0 : index
    %c2 = arith.constant 2 : index
    %c0_33 = arith.constant 0 : index
    %21 = vector.load %arg11[%c0_32, %c2, %c0_33] : memref<2x18x32xf32, #tpu.memory_space<vmem>>, vector<1x16x32xf32>
    %22 = vector.shape_cast %21 : vector<1x16x32xf32> to vector<16x32xf32>
    %c2_34 = arith.constant 2 : index
    %c0_35 = arith.constant 0 : index
    %c0_36 = arith.constant 0 : index
    %23 = vector.load %arg2[%c2_34, %c0_35, %c0_36] : memref<3x32x128xf32, #tpu.memory_space<vmem>>, vector<1x32x128xf32>
    %24 = vector.shape_cast %23 : vector<1x32x128xf32> to vector<32x128xf32>
    %cst_37 = arith.constant dense<0.000000e+00> : vector<16x128xf32>
    %25 = tpu.matmul %22, %24, %cst_37 {dimension_numbers = #tpu.dot_dimension_numbers<[1], [0], [0], [1], [0, 0, 1, 1], [], []>} : vector<16x32xf32>, vector<32x128xf32>, vector<16x128xf32> -> vector<16x128xf32>
    %26 = arith.addf %20, %25 : vector<16x128xf32>
    %c0_38 = arith.constant 0 : index
    %c0_39 = arith.constant 0 : index
    %c0_40 = arith.constant 0 : index
    %27 = vector.load %arg12[%c0_38, %c0_39, %c0_40] : memref<2x18x32xf32, #tpu.memory_space<vmem>>, vector<1x16x32xf32>
    %28 = vector.shape_cast %27 : vector<1x16x32xf32> to vector<16x32xf32>
    %c0_41 = arith.constant 0 : index
    %c0_42 = arith.constant 0 : index
    %c0_43 = arith.constant 0 : index
    %29 = vector.load %arg3[%c0_41, %c0_42, %c0_43] : memref<3x32x128xf32, #tpu.memory_space<vmem>>, vector<1x32x128xf32>
    %30 = vector.shape_cast %29 : vector<1x32x128xf32> to vector<32x128xf32>
    %cst_44 = arith.constant dense<0.000000e+00> : vector<16x128xf32>
    %31 = tpu.matmul %28, %30, %cst_44 {dimension_numbers = #tpu.dot_dimension_numbers<[1], [0], [0], [1], [0, 0, 1, 1], [], []>} : vector<16x32xf32>, vector<32x128xf32>, vector<16x128xf32> -> vector<16x128xf32>
    %32 = arith.addf %26, %31 : vector<16x128xf32>
    %c0_45 = arith.constant 0 : index
    %c1_46 = arith.constant 1 : index
    %c0_47 = arith.constant 0 : index
    %33 = vector.load %arg12[%c0_45, %c1_46, %c0_47] : memref<2x18x32xf32, #tpu.memory_space<vmem>>, vector<1x16x32xf32>
    %34 = vector.shape_cast %33 : vector<1x16x32xf32> to vector<16x32xf32>
    %c1_48 = arith.constant 1 : index
    %c0_49 = arith.constant 0 : index
    %c0_50 = arith.constant 0 : index
    %35 = vector.load %arg3[%c1_48, %c0_49, %c0_50] : memref<3x32x128xf32, #tpu.memory_space<vmem>>, vector<1x32x128xf32>
    %36 = vector.shape_cast %35 : vector<1x32x128xf32> to vector<32x128xf32>
    %cst_51 = arith.constant dense<0.000000e+00> : vector<16x128xf32>
    %37 = tpu.matmul %34, %36, %cst_51 {dimension_numbers = #tpu.dot_dimension_numbers<[1], [0], [0], [1], [0, 0, 1, 1], [], []>} : vector<16x32xf32>, vector<32x128xf32>, vector<16x128xf32> -> vector<16x128xf32>
    %38 = arith.addf %32, %37 : vector<16x128xf32>
    %c0_52 = arith.constant 0 : index
    %c2_53 = arith.constant 2 : index
    %c0_54 = arith.constant 0 : index
    %39 = vector.load %arg12[%c0_52, %c2_53, %c0_54] : memref<2x18x32xf32, #tpu.memory_space<vmem>>, vector<1x16x32xf32>
    %40 = vector.shape_cast %39 : vector<1x16x32xf32> to vector<16x32xf32>
    %c2_55 = arith.constant 2 : index
    %c0_56 = arith.constant 0 : index
    %c0_57 = arith.constant 0 : index
    %41 = vector.load %arg3[%c2_55, %c0_56, %c0_57] : memref<3x32x128xf32, #tpu.memory_space<vmem>>, vector<1x32x128xf32>
    %42 = vector.shape_cast %41 : vector<1x32x128xf32> to vector<32x128xf32>
    %cst_58 = arith.constant dense<0.000000e+00> : vector<16x128xf32>
    %43 = tpu.matmul %40, %42, %cst_58 {dimension_numbers = #tpu.dot_dimension_numbers<[1], [0], [0], [1], [0, 0, 1, 1], [], []>} : vector<16x32xf32>, vector<32x128xf32>, vector<16x128xf32> -> vector<16x128xf32>
    %44 = arith.addf %38, %43 : vector<16x128xf32>
    %c0_59 = arith.constant 0 : index
    %c0_60 = arith.constant 0 : index
    %c0_61 = arith.constant 0 : index
    %45 = vector.load %arg13[%c0_59, %c0_60, %c0_61] : memref<2x16x128xf32, #tpu.memory_space<vmem>>, vector<1x16x128xf32>
    %46 = vector.shape_cast %45 : vector<1x16x128xf32> to vector<16x128xf32>
    %47 = vector.shape_cast %44 : vector<16x128xf32> to vector<1x16x128xf32>
    tpu.vector_store %arg13[%c0_59, %c0_60, %c0_61], %47 {strides = array<i32>} : memref<2x16x128xf32, #tpu.memory_space<vmem>>, vector<1x16x128xf32>,
    %cst_62 = arith.constant 0.000000e+00 : f32
    %48 = vector.broadcast %cst_62 : f32 to vector<16x128xf32>
    %c1_63 = arith.constant 1 : index
    %c0_64 = arith.constant 0 : index
    %c0_65 = arith.constant 0 : index
    %49 = vector.load %arg11[%c1_63, %c0_64, %c0_65] : memref<2x18x32xf32, #tpu.memory_space<vmem>>, vector<1x16x32xf32>
    %50 = vector.shape_cast %49 : vector<1x16x32xf32> to vector<16x32xf32>
    %c0_66 = arith.constant 0 : index
    %c0_67 = arith.constant 0 : index
    %c0_68 = arith.constant 0 : index
    %51 = vector.load %arg2[%c0_66, %c0_67, %c0_68] : memref<3x32x128xf32, #tpu.memory_space<vmem>>, vector<1x32x128xf32>
    %52 = vector.shape_cast %51 : vector<1x32x128xf32> to vector<32x128xf32>
    %cst_69 = arith.constant dense<0.000000e+00> : vector<16x128xf32>
    %53 = tpu.matmul %50, %52, %cst_69 {dimension_numbers = #tpu.dot_dimension_numbers<[1], [0], [0], [1], [0, 0, 1, 1], [], []>} : vector<16x32xf32>, vector<32x128xf32>, vector<16x128xf32> -> vector<16x128xf32>
    %54 = arith.addf %48, %53 : vector<16x128xf32>
    %c1_70 = arith.constant 1 : index
    %c1_71 = arith.constant 1 : index
    %c0_72 = arith.constant 0 : index
    %55 = vector.load %arg11[%c1_70, %c1_71, %c0_72] : memref<2x18x32xf32, #tpu.memory_space<vmem>>, vector<1x16x32xf32>
    %56 = vector.shape_cast %55 : vector<1x16x32xf32> to vector<16x32xf32>
    %c1_73 = arith.constant 1 : index
    %c0_74 = arith.constant 0 : index
    %c0_75 = arith.constant 0 : index
    %57 = vector.load %arg2[%c1_73, %c0_74, %c0_75] : memref<3x32x128xf32, #tpu.memory_space<vmem>>, vector<1x32x128xf32>
    %58 = vector.shape_cast %57 : vector<1x32x128xf32> to vector<32x128xf32>
    %cst_76 = arith.constant dense<0.000000e+00> : vector<16x128xf32>
    %59 = tpu.matmul %56, %58, %cst_76 {dimension_numbers = #tpu.dot_dimension_numbers<[1], [0], [0], [1], [0, 0, 1, 1], [], []>} : vector<16x32xf32>, vector<32x128xf32>, vector<16x128xf32> -> vector<16x128xf32>
    %60 = arith.addf %54, %59 : vector<16x128xf32>
    %c1_77 = arith.constant 1 : index
    %c2_78 = arith.constant 2 : index
    %c0_79 = arith.constant 0 : index
    %61 = vector.load %arg11[%c1_77, %c2_78, %c0_79] : memref<2x18x32xf32, #tpu.memory_space<vmem>>, vector<1x16x32xf32>
    %62 = vector.shape_cast %61 : vector<1x16x32xf32> to vector<16x32xf32>
    %c2_80 = arith.constant 2 : index
    %c0_81 = arith.constant 0 : index
    %c0_82 = arith.constant 0 : index
    %63 = vector.load %arg2[%c2_80, %c0_81, %c0_82] : memref<3x32x128xf32, #tpu.memory_space<vmem>>, vector<1x32x128xf32>
    %64 = vector.shape_cast %63 : vector<1x32x128xf32> to vector<32x128xf32>
    %cst_83 = arith.constant dense<0.000000e+00> : vector<16x128xf32>
    %65 = tpu.matmul %62, %64, %cst_83 {dimension_numbers = #tpu.dot_dimension_numbers<[1], [0], [0], [1], [0, 0, 1, 1], [], []>} : vector<16x32xf32>, vector<32x128xf32>, vector<16x128xf32> -> vector<16x128xf32>
    %66 = arith.addf %60, %65 : vector<16x128xf32>
    %c1_84 = arith.constant 1 : index
    %c0_85 = arith.constant 0 : index
    %c0_86 = arith.constant 0 : index
    %67 = vector.load %arg12[%c1_84, %c0_85, %c0_86] : memref<2x18x32xf32, #tpu.memory_space<vmem>>, vector<1x16x32xf32>
    %68 = vector.shape_cast %67 : vector<1x16x32xf32> to vector<16x32xf32>
    %c0_87 = arith.constant 0 : index
    %c0_88 = arith.constant 0 : index
    %c0_89 = arith.constant 0 : index
    %69 = vector.load %arg3[%c0_87, %c0_88, %c0_89] : memref<3x32x128xf32, #tpu.memory_space<vmem>>, vector<1x32x128xf32>
    %70 = vector.shape_cast %69 : vector<1x32x128xf32> to vector<32x128xf32>
    %cst_90 = arith.constant dense<0.000000e+00> : vector<16x128xf32>
    %71 = tpu.matmul %68, %70, %cst_90 {dimension_numbers = #tpu.dot_dimension_numbers<[1], [0], [0], [1], [0, 0, 1, 1], [], []>} : vector<16x32xf32>, vector<32x128xf32>, vector<16x128xf32> -> vector<16x128xf32>
    %72 = arith.addf %66, %71 : vector<16x128xf32>
    %c1_91 = arith.constant 1 : index
    %c1_92 = arith.constant 1 : index
    %c0_93 = arith.constant 0 : index
    %73 = vector.load %arg12[%c1_91, %c1_92, %c0_93] : memref<2x18x32xf32, #tpu.memory_space<vmem>>, vector<1x16x32xf32>
    %74 = vector.shape_cast %73 : vector<1x16x32xf32> to vector<16x32xf32>
    %c1_94 = arith.constant 1 : index
    %c0_95 = arith.constant 0 : index
    %c0_96 = arith.constant 0 : index
    %75 = vector.load %arg3[%c1_94, %c0_95, %c0_96] : memref<3x32x128xf32, #tpu.memory_space<vmem>>, vector<1x32x128xf32>
    %76 = vector.shape_cast %75 : vector<1x32x128xf32> to vector<32x128xf32>
    %cst_97 = arith.constant dense<0.000000e+00> : vector<16x128xf32>
    %77 = tpu.matmul %74, %76, %cst_97 {dimension_numbers = #tpu.dot_dimension_numbers<[1], [0], [0], [1], [0, 0, 1, 1], [], []>} : vector<16x32xf32>, vector<32x128xf32>, vector<16x128xf32> -> vector<16x128xf32>
    %78 = arith.addf %72, %77 : vector<16x128xf32>
    %c1_98 = arith.constant 1 : index
    %c2_99 = arith.constant 2 : index
    %c0_100 = arith.constant 0 : index
    %79 = vector.load %arg12[%c1_98, %c2_99, %c0_100] : memref<2x18x32xf32, #tpu.memory_space<vmem>>, vector<1x16x32xf32>
    %80 = vector.shape_cast %79 : vector<1x16x32xf32> to vector<16x32xf32>
    %c2_101 = arith.constant 2 : index
    %c0_102 = arith.constant 0 : index
    %c0_103 = arith.constant 0 : index
    %81 = vector.load %arg3[%c2_101, %c0_102, %c0_103] : memref<3x32x128xf32, #tpu.memory_space<vmem>>, vector<1x32x128xf32>
    %82 = vector.shape_cast %81 : vector<1x32x128xf32> to vector<32x128xf32>
    %cst_104 = arith.constant dense<0.000000e+00> : vector<16x128xf32>
    %83 = tpu.matmul %80, %82, %cst_104 {dimension_numbers = #tpu.dot_dimension_numbers<[1], [0], [0], [1], [0, 0, 1, 1], [], []>} : vector<16x32xf32>, vector<32x128xf32>, vector<16x128xf32> -> vector<16x128xf32>
    %84 = arith.addf %78, %83 : vector<16x128xf32>
    %c1_105 = arith.constant 1 : index
    %c0_106 = arith.constant 0 : index
    %c0_107 = arith.constant 0 : index
    %85 = vector.load %arg13[%c1_105, %c0_106, %c0_107] : memref<2x16x128xf32, #tpu.memory_space<vmem>>, vector<1x16x128xf32>
    %86 = vector.shape_cast %85 : vector<1x16x128xf32> to vector<16x128xf32>
    %87 = vector.shape_cast %84 : vector<16x128xf32> to vector<1x16x128xf32>
    tpu.vector_store %arg13[%c1_105, %c0_106, %c0_107], %87 {strides = array<i32>} : memref<2x16x128xf32, #tpu.memory_space<vmem>>, vector<1x16x128xf32>,
    %c0_108 = arith.constant 0 : index
    %c0_109 = arith.constant 0 : index
    %c0_110 = arith.constant 0 : index
    %88 = vector.load %arg13[%c0_108, %c0_109, %c0_110] : memref<2x16x128xf32, #tpu.memory_space<vmem>>, vector<2x16x128xf32>
    %cst_111 = arith.constant dense<0.000000e+00> : vector<16x128xf32>
    %89 = vector.multi_reduction <add>, %88, %cst_111 [0] : vector<2x16x128xf32> to vector<16x128xf32>
    %cst_112 = arith.constant dense<0.000000e+00> : vector<128xf32>
    %90 = vector.multi_reduction <add>, %89, %cst_112 [0] : vector<16x128xf32> to vector<128xf32>
    %91 = vector.shape_cast %90 : vector<128xf32> to vector<1x128xf32>
    %c0_113 = arith.constant 0 : index
    %c0_114 = arith.constant 0 : index
    %92 = vector.load %arg9[%c0_113, %c0_114] : memref<128x128xf32, #tpu.memory_space<vmem>>, vector<128x128xf32>
    %cst_115 = arith.constant dense<0.000000e+00> : vector<1x128xf32>
    %93 = tpu.matmul %91, %92, %cst_115 {dimension_numbers = #tpu.dot_dimension_numbers<[1], [0], [0], [1], [0, 0, 1, 1], [], []>} : vector<1x128xf32>, vector<128x128xf32>, vector<1x128xf32> -> vector<1x128xf32>
    %cst_116 = arith.constant 0.001953125 : f32
    %94 = vector.broadcast %cst_116 : f32 to vector<1x128xf32>
    %95 = arith.mulf %93, %94 : vector<1x128xf32>
    %96 = vector.shape_cast %95 : vector<1x128xf32> to vector<1x1x128xf32>
    %97 = vector.broadcast %96 : vector<1x1x128xf32> to vector<2x16x128xf32>
    %98 = arith.subf %88, %97 : vector<2x16x128xf32>
    %99 = arith.mulf %98, %98 : vector<2x16x128xf32>
    %cst_117 = arith.constant dense<0.000000e+00> : vector<16x128xf32>
    %100 = vector.multi_reduction <add>, %99, %cst_117 [0] : vector<2x16x128xf32> to vector<16x128xf32>
    %cst_118 = arith.constant dense<0.000000e+00> : vector<128xf32>
    %101 = vector.multi_reduction <add>, %100, %cst_118 [0] : vector<16x128xf32> to vector<128xf32>
    %102 = vector.shape_cast %101 : vector<128xf32> to vector<1x128xf32>
    %c0_119 = arith.constant 0 : index
    %c0_120 = arith.constant 0 : index
    %103 = vector.load %arg9[%c0_119, %c0_120] : memref<128x128xf32, #tpu.memory_space<vmem>>, vector<128x128xf32>
    %cst_121 = arith.constant dense<0.000000e+00> : vector<1x128xf32>
    %104 = tpu.matmul %102, %103, %cst_121 {dimension_numbers = #tpu.dot_dimension_numbers<[1], [0], [0], [1], [0, 0, 1, 1], [], []>} : vector<1x128xf32>, vector<128x128xf32>, vector<1x128xf32> -> vector<1x128xf32>
    %cst_122 = arith.constant 0.001953125 : f32
    %105 = vector.broadcast %cst_122 : f32 to vector<1x128xf32>
    %106 = arith.mulf %104, %105 : vector<1x128xf32>
    %c0_123 = arith.constant 0 : index
    %c0_124 = arith.constant 0 : index
    %107 = vector.load %arg5[%c0_123, %c0_124] : memref<1x128xf32, #tpu.memory_space<vmem>>, vector<1x128xf32>
    %cst_125 = arith.constant 9.99999974E-6 : f32
    %108 = vector.broadcast %cst_125 : f32 to vector<1x128xf32>
    %109 = arith.addf %106, %108 : vector<1x128xf32>
    %110 = math.rsqrt %109 : vector<1x128xf32>
    %111 = arith.mulf %107, %110 : vector<1x128xf32>
    %112 = vector.shape_cast %111 : vector<1x128xf32> to vector<1x1x128xf32>
    %113 = vector.broadcast %112 : vector<1x1x128xf32> to vector<2x16x128xf32>
    %114 = arith.mulf %98, %113 : vector<2x16x128xf32>
    %c0_126 = arith.constant 0 : index
    %c0_127 = arith.constant 0 : index
    %115 = vector.load %arg6[%c0_126, %c0_127] : memref<1x128xf32, #tpu.memory_space<vmem>>, vector<1x128xf32>
    %116 = vector.shape_cast %115 : vector<1x128xf32> to vector<1x1x128xf32>
    %117 = vector.broadcast %116 : vector<1x1x128xf32> to vector<2x16x128xf32>
    %118 = arith.addf %114, %117 : vector<2x16x128xf32>
    %cst_128 = arith.constant 0.000000e+00 : f32
    %119 = vector.broadcast %cst_128 : f32 to vector<2x16x128xf32>
    %120 = arith.maximumf %118, %119 : vector<2x16x128xf32>
    %cst_129 = arith.constant 0.000000e+00 : f32
    %121 = vector.broadcast %cst_129 : f32 to vector<2x18x128xf32>
    %c0_130 = arith.constant 0 : index
    %c0_131 = arith.constant 0 : index
    %c0_132 = arith.constant 0 : index
    %122 = vector.load %arg14[%c0_130, %c0_131, %c0_132] : memref<2x18x128xf32, #tpu.memory_space<vmem>>, vector<2x18x128xf32>
    tpu.vector_store %arg14[%c0_130, %c0_131, %c0_132], %121 {strides = array<i32>} : memref<2x18x128xf32, #tpu.memory_space<vmem>>, vector<2x18x128xf32>,
    %c0_133 = arith.constant 0 : index
    %c1_134 = arith.constant 1 : index
    %c0_135 = arith.constant 0 : index
    %123 = vector.load %arg14[%c0_133, %c1_134, %c0_135] : memref<2x18x128xf32, #tpu.memory_space<vmem>>, vector<2x16x128xf32>
    tpu.vector_store %arg14[%c0_133, %c1_134, %c0_135], %120 {strides = array<i32>} : memref<2x18x128xf32, #tpu.memory_space<vmem>>, vector<2x16x128xf32>,
    %cst_136 = arith.constant 0.000000e+00 : f32
    %124 = vector.broadcast %cst_136 : f32 to vector<16x128xf32>
    %c0_137 = arith.constant 0 : index
    %c0_138 = arith.constant 0 : index
    %c0_139 = arith.constant 0 : index
    %125 = vector.load %arg14[%c0_137, %c0_138, %c0_139] : memref<2x18x128xf32, #tpu.memory_space<vmem>>, vector<1x16x128xf32>
    %126 = vector.shape_cast %125 : vector<1x16x128xf32> to vector<16x128xf32>
    %c0_140 = arith.constant 0 : index
    %c0_141 = arith.constant 0 : index
    %c0_142 = arith.constant 0 : index
    %127 = vector.load %arg4[%c0_140, %c0_141, %c0_142] : memref<3x128x128xf32, #tpu.memory_space<vmem>>, vector<1x128x128xf32>
    %128 = vector.shape_cast %127 : vector<1x128x128xf32> to vector<128x128xf32>
    %cst_143 = arith.constant dense<0.000000e+00> : vector<16x128xf32>
    %129 = tpu.matmul %126, %128, %cst_143 {dimension_numbers = #tpu.dot_dimension_numbers<[1], [0], [0], [1], [0, 0, 1, 1], [], []>} : vector<16x128xf32>, vector<128x128xf32>, vector<16x128xf32> -> vector<16x128xf32>
    %130 = arith.addf %124, %129 : vector<16x128xf32>
    %c0_144 = arith.constant 0 : index
    %c1_145 = arith.constant 1 : index
    %c0_146 = arith.constant 0 : index
    %131 = vector.load %arg14[%c0_144, %c1_145, %c0_146] : memref<2x18x128xf32, #tpu.memory_space<vmem>>, vector<1x16x128xf32>
    %132 = vector.shape_cast %131 : vector<1x16x128xf32> to vector<16x128xf32>
    %c1_147 = arith.constant 1 : index
    %c0_148 = arith.constant 0 : index
    %c0_149 = arith.constant 0 : index
    %133 = vector.load %arg4[%c1_147, %c0_148, %c0_149] : memref<3x128x128xf32, #tpu.memory_space<vmem>>, vector<1x128x128xf32>
    %134 = vector.shape_cast %133 : vector<1x128x128xf32> to vector<128x128xf32>
    %cst_150 = arith.constant dense<0.000000e+00> : vector<16x128xf32>
    %135 = tpu.matmul %132, %134, %cst_150 {dimension_numbers = #tpu.dot_dimension_numbers<[1], [0], [0], [1], [0, 0, 1, 1], [], []>} : vector<16x128xf32>, vector<128x128xf32>, vector<16x128xf32> -> vector<16x128xf32>
    %136 = arith.addf %130, %135 : vector<16x128xf32>
    %c0_151 = arith.constant 0 : index
    %c2_152 = arith.constant 2 : index
    %c0_153 = arith.constant 0 : index
    %137 = vector.load %arg14[%c0_151, %c2_152, %c0_153] : memref<2x18x128xf32, #tpu.memory_space<vmem>>, vector<1x16x128xf32>
    %138 = vector.shape_cast %137 : vector<1x16x128xf32> to vector<16x128xf32>
    %c2_154 = arith.constant 2 : index
    %c0_155 = arith.constant 0 : index
    %c0_156 = arith.constant 0 : index
    %139 = vector.load %arg4[%c2_154, %c0_155, %c0_156] : memref<3x128x128xf32, #tpu.memory_space<vmem>>, vector<1x128x128xf32>
    %140 = vector.shape_cast %139 : vector<1x128x128xf32> to vector<128x128xf32>
    %cst_157 = arith.constant dense<0.000000e+00> : vector<16x128xf32>
    %141 = tpu.matmul %138, %140, %cst_157 {dimension_numbers = #tpu.dot_dimension_numbers<[1], [0], [0], [1], [0, 0, 1, 1], [], []>} : vector<16x128xf32>, vector<128x128xf32>, vector<16x128xf32> -> vector<16x128xf32>
    %142 = arith.addf %136, %141 : vector<16x128xf32>
    %c0_158 = arith.constant 0 : index
    %c0_159 = arith.constant 0 : index
    %c0_160 = arith.constant 0 : index
    %143 = vector.load %arg13[%c0_158, %c0_159, %c0_160] : memref<2x16x128xf32, #tpu.memory_space<vmem>>, vector<1x16x128xf32>
    %144 = vector.shape_cast %143 : vector<1x16x128xf32> to vector<16x128xf32>
    %145 = vector.shape_cast %142 : vector<16x128xf32> to vector<1x16x128xf32>
    tpu.vector_store %arg13[%c0_158, %c0_159, %c0_160], %145 {strides = array<i32>} : memref<2x16x128xf32, #tpu.memory_space<vmem>>, vector<1x16x128xf32>,
    %cst_161 = arith.constant 0.000000e+00 : f32
    %146 = vector.broadcast %cst_161 : f32 to vector<16x128xf32>
    %c1_162 = arith.constant 1 : index
    %c0_163 = arith.constant 0 : index
    %c0_164 = arith.constant 0 : index
    %147 = vector.load %arg14[%c1_162, %c0_163, %c0_164] : memref<2x18x128xf32, #tpu.memory_space<vmem>>, vector<1x16x128xf32>
    %148 = vector.shape_cast %147 : vector<1x16x128xf32> to vector<16x128xf32>
    %c0_165 = arith.constant 0 : index
    %c0_166 = arith.constant 0 : index
    %c0_167 = arith.constant 0 : index
    %149 = vector.load %arg4[%c0_165, %c0_166, %c0_167] : memref<3x128x128xf32, #tpu.memory_space<vmem>>, vector<1x128x128xf32>
    %150 = vector.shape_cast %149 : vector<1x128x128xf32> to vector<128x128xf32>
    %cst_168 = arith.constant dense<0.000000e+00> : vector<16x128xf32>
    %151 = tpu.matmul %148, %150, %cst_168 {dimension_numbers = #tpu.dot_dimension_numbers<[1], [0], [0], [1], [0, 0, 1, 1], [], []>} : vector<16x128xf32>, vector<128x128xf32>, vector<16x128xf32> -> vector<16x128xf32>
    %152 = arith.addf %146, %151 : vector<16x128xf32>
    %c1_169 = arith.constant 1 : index
    %c1_170 = arith.constant 1 : index
    %c0_171 = arith.constant 0 : index
    %153 = vector.load %arg14[%c1_169, %c1_170, %c0_171] : memref<2x18x128xf32, #tpu.memory_space<vmem>>, vector<1x16x128xf32>
    %154 = vector.shape_cast %153 : vector<1x16x128xf32> to vector<16x128xf32>
    %c1_172 = arith.constant 1 : index
    %c0_173 = arith.constant 0 : index
    %c0_174 = arith.constant 0 : index
    %155 = vector.load %arg4[%c1_172, %c0_173, %c0_174] : memref<3x128x128xf32, #tpu.memory_space<vmem>>, vector<1x128x128xf32>
    %156 = vector.shape_cast %155 : vector<1x128x128xf32> to vector<128x128xf32>
    %cst_175 = arith.constant dense<0.000000e+00> : vector<16x128xf32>
    %157 = tpu.matmul %154, %156, %cst_175 {dimension_numbers = #tpu.dot_dimension_numbers<[1], [0], [0], [1], [0, 0, 1, 1], [], []>} : vector<16x128xf32>, vector<128x128xf32>, vector<16x128xf32> -> vector<16x128xf32>
    %158 = arith.addf %152, %157 : vector<16x128xf32>
    %c1_176 = arith.constant 1 : index
    %c2_177 = arith.constant 2 : index
    %c0_178 = arith.constant 0 : index
    %159 = vector.load %arg14[%c1_176, %c2_177, %c0_178] : memref<2x18x128xf32, #tpu.memory_space<vmem>>, vector<1x16x128xf32>
    %160 = vector.shape_cast %159 : vector<1x16x128xf32> to vector<16x128xf32>
    %c2_179 = arith.constant 2 : index
    %c0_180 = arith.constant 0 : index
    %c0_181 = arith.constant 0 : index
    %161 = vector.load %arg4[%c2_179, %c0_180, %c0_181] : memref<3x128x128xf32, #tpu.memory_space<vmem>>, vector<1x128x128xf32>
    %162 = vector.shape_cast %161 : vector<1x128x128xf32> to vector<128x128xf32>
    %cst_182 = arith.constant dense<0.000000e+00> : vector<16x128xf32>
    %163 = tpu.matmul %160, %162, %cst_182 {dimension_numbers = #tpu.dot_dimension_numbers<[1], [0], [0], [1], [0, 0, 1, 1], [], []>} : vector<16x128xf32>, vector<128x128xf32>, vector<16x128xf32> -> vector<16x128xf32>
    %164 = arith.addf %158, %163 : vector<16x128xf32>
    %c1_183 = arith.constant 1 : index
    %c0_184 = arith.constant 0 : index
    %c0_185 = arith.constant 0 : index
    %165 = vector.load %arg13[%c1_183, %c0_184, %c0_185] : memref<2x16x128xf32, #tpu.memory_space<vmem>>, vector<1x16x128xf32>
    %166 = vector.shape_cast %165 : vector<1x16x128xf32> to vector<16x128xf32>
    %167 = vector.shape_cast %164 : vector<16x128xf32> to vector<1x16x128xf32>
    tpu.vector_store %arg13[%c1_183, %c0_184, %c0_185], %167 {strides = array<i32>} : memref<2x16x128xf32, #tpu.memory_space<vmem>>, vector<1x16x128xf32>,
    %c0_186 = arith.constant 0 : index
    %c0_187 = arith.constant 0 : index
    %c0_188 = arith.constant 0 : index
    %168 = vector.load %arg13[%c0_186, %c0_187, %c0_188] : memref<2x16x128xf32, #tpu.memory_space<vmem>>, vector<2x16x128xf32>
    %cst_189 = arith.constant dense<0.000000e+00> : vector<16x128xf32>
    %169 = vector.multi_reduction <add>, %168, %cst_189 [0] : vector<2x16x128xf32> to vector<16x128xf32>
    %cst_190 = arith.constant dense<0.000000e+00> : vector<128xf32>
    %170 = vector.multi_reduction <add>, %169, %cst_190 [0] : vector<16x128xf32> to vector<128xf32>
    %171 = vector.shape_cast %170 : vector<128xf32> to vector<1x128xf32>
    %c0_191 = arith.constant 0 : index
    %c0_192 = arith.constant 0 : index
    %172 = vector.load %arg9[%c0_191, %c0_192] : memref<128x128xf32, #tpu.memory_space<vmem>>, vector<128x128xf32>
    %cst_193 = arith.constant dense<0.000000e+00> : vector<1x128xf32>
    %173 = tpu.matmul %171, %172, %cst_193 {dimension_numbers = #tpu.dot_dimension_numbers<[1], [0], [0], [1], [0, 0, 1, 1], [], []>} : vector<1x128xf32>, vector<128x128xf32>, vector<1x128xf32> -> vector<1x128xf32>
    %cst_194 = arith.constant 0.001953125 : f32
    %174 = vector.broadcast %cst_194 : f32 to vector<1x128xf32>
    %175 = arith.mulf %173, %174 : vector<1x128xf32>
    %176 = vector.shape_cast %175 : vector<1x128xf32> to vector<1x1x128xf32>
    %177 = vector.broadcast %176 : vector<1x1x128xf32> to vector<2x16x128xf32>
    %178 = arith.subf %168, %177 : vector<2x16x128xf32>
    %179 = arith.mulf %178, %178 : vector<2x16x128xf32>
    %cst_195 = arith.constant dense<0.000000e+00> : vector<16x128xf32>
    %180 = vector.multi_reduction <add>, %179, %cst_195 [0] : vector<2x16x128xf32> to vector<16x128xf32>
    %cst_196 = arith.constant dense<0.000000e+00> : vector<128xf32>
    %181 = vector.multi_reduction <add>, %180, %cst_196 [0] : vector<16x128xf32> to vector<128xf32>
    %182 = vector.shape_cast %181 : vector<128xf32> to vector<1x128xf32>
    %c0_197 = arith.constant 0 : index
    %c0_198 = arith.constant 0 : index
    %183 = vector.load %arg9[%c0_197, %c0_198] : memref<128x128xf32, #tpu.memory_space<vmem>>, vector<128x128xf32>
    %cst_199 = arith.constant dense<0.000000e+00> : vector<1x128xf32>
    %184 = tpu.matmul %182, %183, %cst_199 {dimension_numbers = #tpu.dot_dimension_numbers<[1], [0], [0], [1], [0, 0, 1, 1], [], []>} : vector<1x128xf32>, vector<128x128xf32>, vector<1x128xf32> -> vector<1x128xf32>
    %cst_200 = arith.constant 0.001953125 : f32
    %185 = vector.broadcast %cst_200 : f32 to vector<1x128xf32>
    %186 = arith.mulf %184, %185 : vector<1x128xf32>
    %c0_201 = arith.constant 0 : index
    %c0_202 = arith.constant 0 : index
    %187 = vector.load %arg7[%c0_201, %c0_202] : memref<1x128xf32, #tpu.memory_space<vmem>>, vector<1x128xf32>
    %cst_203 = arith.constant 9.99999974E-6 : f32
    %188 = vector.broadcast %cst_203 : f32 to vector<1x128xf32>
    %189 = arith.addf %186, %188 : vector<1x128xf32>
    %190 = math.rsqrt %189 : vector<1x128xf32>
    %191 = arith.mulf %187, %190 : vector<1x128xf32>
    %192 = vector.shape_cast %191 : vector<1x128xf32> to vector<1x1x128xf32>
    %193 = vector.broadcast %192 : vector<1x1x128xf32> to vector<2x16x128xf32>
    %194 = arith.mulf %178, %193 : vector<2x16x128xf32>
    %c0_204 = arith.constant 0 : index
    %c0_205 = arith.constant 0 : index
    %195 = vector.load %arg8[%c0_204, %c0_205] : memref<1x128xf32, #tpu.memory_space<vmem>>, vector<1x128xf32>
    %196 = vector.shape_cast %195 : vector<1x128xf32> to vector<1x1x128xf32>
    %197 = vector.broadcast %196 : vector<1x1x128xf32> to vector<2x16x128xf32>
    %198 = arith.addf %194, %197 : vector<2x16x128xf32>
    %cst_206 = arith.constant 0.000000e+00 : f32
    %199 = vector.broadcast %cst_206 : f32 to vector<2x16x128xf32>
    %200 = arith.maximumf %198, %199 : vector<2x16x128xf32>
    %c0_207 = arith.constant 0 : index
    %c0_208 = arith.constant 0 : index
    %c0_209 = arith.constant 0 : index
    %201 = vector.load %arg10[%c0_207, %c0_208, %c0_209] : memref<2x16x128xf32, #tpu.memory_space<vmem>>, vector<2x16x128xf32>
    tpu.vector_store %arg10[%c0_207, %c0_208, %c0_209], %200 {strides = array<i32>} : memref<2x16x128xf32, #tpu.memory_space<vmem>>, vector<2x16x128xf32>,
    return
  }
}

</mosaic_0001>

<llo_original>
// kernel: tile.28
$region0: #{tile.28}
  #allocation0 [shape = 's32[1]{0}', space=sflag, size = 0x4, scoped, tag = 'scoped memory for tile.28']
  %s0 = inlined_call_operand.vmem [shape: f32[2], index: 0, kind: input, shape index: {}]
  %s1 = inlined_call_operand.vmem [shape: f32[32,2], index: 1, kind: output, shape index: {}]
  // Predicated region
  $region2: #{tile.28} parent=0 // pred_check
    _
  $region3: #{tile.28} parent=0 // pred_check_branch
    %3 = sbr.rel (0) target = $region5
  $region4: #{tile.28} parent=0 // pred_region
    _
  $region5: #{tile.28} parent=0 // pred_fallthru
    _
  %v4 = vld [vmem:[%s0] ss:$0 sm:$0xff]
  %5 = vst [vmem:[%s1] sm:$0xff] %v4
  %s6 = scalar_lea.vmem %s1, 8
  %7 = vst [vmem:[%s6] sm:$0xff] %v4
  %s8 = scalar_lea.vmem %s1, 16
  %9 = vst [vmem:[%s8] sm:$0xff] %v4
  %s10 = scalar_lea.vmem %s1, 24
  %11 = vst [vmem:[%s10] sm:$0xff] %v4

// kernel: tile.29
$region0: #{tile.29}
  %s0 = inlined_call_operand.vmem [shape: f32[32,2], index: 0, kind: input, shape index: {}]
  %s1 = inlined_call_operand.vmem [shape: f32[1,64], index: 1, kind: output, shape index: {}]
  $region1: #{tile.29} parent=0
    #allocation0 [shape = 'u8[4096]{0}', space=vmem, size = 0x1000, scoped, tag = 'scoped mem for output reshape']
    %v2 = vld [vmem:[%s0] sm:$0x1]
    %vm3 = vcmask 15360
    %4 = vst.msk [vmem:[#allocation0] sm:$0x1] %vm3, %v2
    %s5 = scalar_lea.vmem %s0, 31
    %v6 = vld [vmem:[%s5] sm:$0x1]
    %7 = vrot.lane.b32.xlu0 %v6, 62
    %v8 = vpop.permute.xlu0 %7
    %vm9 = vcmask 523760
    %10 = vst.msk [vmem:[#allocation0] sm:$0x1] %vm9, %v8
    %s11 = scalar_lea.vmem %s0, 30
    %v12 = vld [vmem:[%s11] sm:$0x1]
    %13 = vrot.lane.b32.xlu0 %v12, 60
    %v14 = vpop.permute.xlu0 %13
    %vm15 = vcmask 507360
    %16 = vst.msk [vmem:[#allocation0] sm:$0x1] %vm15, %v14
    %s17 = scalar_lea.vmem %s0, 29
    %v18 = vld [vmem:[%s17] sm:$0x1]
    %19 = vrot.lane.b32.xlu0 %v18, 58
    %v20 = vpop.permute.xlu0 %19
    %vm21 = vcmask 490960
    %22 = vst.msk [vmem:[#allocation0] sm:$0x1] %vm21, %v20
    %s23 = scalar_lea.vmem %s0, 28
    %v24 = vld [vmem:[%s23] sm:$0x1]
    %25 = vrot.lane.b32.xlu0 %v24, 56
    %v26 = vpop.permute.xlu0 %25
    %vm27 = vcmask 474560
    %28 = vst.msk [vmem:[#allocation0] sm:$0x1] %vm27, %v26
    %s29 = scalar_lea.vmem %s0, 27
    %v30 = vld [vmem:[%s29] sm:$0x1]
    %31 = vrot.lane.b32.xlu0 %v30, 54
    %v32 = vpop.permute.xlu0 %31
    %vm33 = vcmask 458160
    %34 = vst.msk [vmem:[#allocation0] sm:$0x1] %vm33, %v32
    %s35 = scalar_lea.vmem %s0, 26
    %v36 = vld [vmem:[%s35] sm:$0x1]
    %37 = vrot.lane.b32.xlu0 %v36, 52
    %v38 = vpop.permute.xlu0 %37
    %vm39 = vcmask 441760
    %40 = vst.msk [vmem:[#allocation0] sm:$0x1] %vm39, %v38
    %s41 = scalar_lea.vmem %s0, 25
    %v42 = vld [vmem:[%s41] sm:$0x1]
    %43 = vrot.lane.b32.xlu0 %v42, 50
    %v44 = vpop.permute.xlu0 %43
    %vm45 = vcmask 425360
    %46 = vst.msk [vmem:[#allocation0] sm:$0x1] %vm45, %v44
    %s47 = scalar_lea.vmem %s0, 24
    %v48 = vld [vmem:[%s47] sm:$0x1]
    %49 = vrot.lane.b32.xlu0 %v48, 48
    %v50 = vpop.permute.xlu0 %49
    %vm51 = vcmask 408960
    %52 = vst.msk [vmem:[#allocation0] sm:$0x1] %vm51, %v50
    %s53 = scalar_lea.vmem %s0, 23
    %v54 = vld [vmem:[%s53] sm:$0x1]
    %55 = vrot.lane.b32.xlu0 %v54, 46
    %v56 = vpop.permute.xlu0 %55
    %vm57 = vcmask 392560
    %58 = vst.msk [vmem:[#allocation0] sm:$0x1] %vm57, %v56
    %s59 = scalar_lea.vmem %s0, 22
    %v60 = vld [vmem:[%s59] sm:$0x1]
    %61 = vrot.lane.b32.xlu0 %v60, 44
    %v62 = vpop.permute.xlu0 %61
    %vm63 = vcmask 376160
    %64 = vst.msk [vmem:[#allocation0] sm:$0x1] %vm63, %v62
    %s65 = scalar_lea.vmem %s0, 21
    %v66 = vld [vmem:[%s65] sm:$0x1]
    %67 = vrot.lane.b32.xlu0 %v66, 42
    %v68 = vpop.permute.xlu0 %67
    %vm69 = vcmask 359760
    %70 = vst.msk [vmem:[#allocation0] sm:$0x1] %vm69, %v68
    %s71 = scalar_lea.vmem %s0, 20
    %v72 = vld [vmem:[%s71] sm:$0x1]
    %73 = vrot.lane.b32.xlu0 %v72, 40
    %v74 = vpop.permute.xlu0 %73
    %vm75 = vcmask 343360
    %76 = vst.msk [vmem:[#allocation0] sm:$0x1] %vm75, %v74
    %s77 = scalar_lea.vmem %s0, 19
    %v78 = vld [vmem:[%s77] sm:$0x1]
    %79 = vrot.lane.b32.xlu0 %v78, 38
    %v80 = vpop.permute.xlu0 %79
    %vm81 = vcmask 326960
    %82 = vst.msk [vmem:[#allocation0] sm:$0x1] %vm81, %v80
    %s83 = scalar_lea.vmem %s0, 18
    %v84 = vld [vmem:[%s83] sm:$0x1]
    %85 = vrot.lane.b32.xlu0 %v84, 36
    %v86 = vpop.permute.xlu0 %85
    %vm87 = vcmask 310560
    %88 = vst.msk [vmem:[#allocation0] sm:$0x1] %vm87, %v86
    %s89 = scalar_lea.vmem %s0, 17
    %v90 = vld [vmem:[%s89] sm:$0x1]
    %91 = vrot.lane.b32.xlu0 %v90, 34
    %v92 = vpop.permute.xlu0 %91
    %vm93 = vcmask 294160
    %94 = vst.msk [vmem:[#allocation0] sm:$0x1] %vm93, %v92
    %s95 = scalar_lea.vmem %s0, 16
    %v96 = vld [vmem:[%s95] sm:$0x1]
    %97 = vrot.lane.b32.xlu0 %v96, 32
    %v98 = vpop.permute.xlu0 %97
    %vm99 = vcmask 277760
    %100 = vst.msk [vmem:[#allocation0] sm:$0x1] %vm99, %v98
    %s101 = scalar_lea.vmem %s0, 15
    %v102 = vld [vmem:[%s101] sm:$0x1]
    %103 = vrot.lane.b32.xlu0 %v102, 30
    %v104 = vpop.permute.xlu0 %103
    %vm105 = vcmask 261360
    %106 = vst.msk [vmem:[#allocation0] sm:$0x1] %vm105, %v104
    %s107 = scalar_lea.vmem %s0, 14
    %v108 = vld [vmem:[%s107] sm:$0x1]
    %109 = vrot.lane.b32.xlu0 %v108, 28
    %v110 = vpop.permute.xlu0 %109
    %vm111 = vcmask 244960
    %112 = vst.msk [vmem:[#allocation0] sm:$0x1] %vm111, %v110
    %s113 = scalar_lea.vmem %s0, 13
    %v114 = vld [vmem:[%s113] sm:$0x1]
    %115 = vrot.lane.b32.xlu0 %v114, 26
    %v116 = vpop.permute.xlu0 %115
    %vm117 = vcmask 228560
    %118 = vst.msk [vmem:[#allocation0] sm:$0x1] %vm117, %v116
    %s119 = scalar_lea.vmem %s0, 12
    %v120 = vld [vmem:[%s119] sm:$0x1]
    %121 = vrot.lane.b32.xlu0 %v120, 24
    %v122 = vpop.permute.xlu0 %121
    %vm123 = vcmask 212160
    %124 = vst.msk [vmem:[#allocation0] sm:$0x1] %vm123, %v122
    %s125 = scalar_lea.vmem %s0, 11
    %v126 = vld [vmem:[%s125] sm:$0x1]
    %127 = vrot.lane.b32.xlu0 %v126, 22
    %v128 = vpop.permute.xlu0 %127
    %vm129 = vcmask 195760
    %130 = vst.msk [vmem:[#allocation0] sm:$0x1] %vm129, %v128
    %s131 = scalar_lea.vmem %s0, 10
    %v132 = vld [vmem:[%s131] sm:$0x1]
    %133 = vrot.lane.b32.xlu0 %v132, 20
    %v134 = vpop.permute.xlu0 %133
    %vm135 = vcmask 179360
    %136 = vst.msk [vmem:[#allocation0] sm:$0x1] %vm135, %v134
    %s137 = scalar_lea.vmem %s0, 9
    %v138 = vld [vmem:[%s137] sm:$0x1]
    %139 = vrot.lane.b32.xlu0 %v138, 18
    %v140 = vpop.permute.xlu0 %139
    %vm141 = vcmask 162960
    %142 = vst.msk [vmem:[#allocation0] sm:$0x1] %vm141, %v140
    %s143 = scalar_lea.vmem %s0, 8
    %v144 = vld [vmem:[%s143] sm:$0x1]
    %145 = vrot.lane.b32.xlu0 %v144, 16
    %v146 = vpop.permute.xlu0 %145
    %vm147 = vcmask 146560
    %148 = vst.msk [vmem:[#allocation0] sm:$0x1] %vm147, %v146
    %s149 = scalar_lea.vmem %s0, 7
    %v150 = vld [vmem:[%s149] sm:$0x1]
    %151 = vrot.lane.b32.xlu0 %v150, 14
    %v152 = vpop.permute.xlu0 %151
    %vm153 = vcmask 130160
    %154 = vst.msk [vmem:[#allocation0] sm:$0x1] %vm153, %v152
    %s155 = scalar_lea.vmem %s0, 6
    %v156 = vld [vmem:[%s155] sm:$0x1]
    %157 = vrot.lane.b32.xlu0 %v156, 12
    %v158 = vpop.permute.xlu0 %157
    %vm159 = vcmask 113760
    %160 = vst.msk [vmem:[#allocation0] sm:$0x1] %vm159, %v158
    %s161 = scalar_lea.vmem %s0, 5
    %v162 = vld [vmem:[%s161] sm:$0x1]
    %163 = vrot.lane.b32.xlu0 %v162, 10
    %v164 = vpop.permute.xlu0 %163
    %vm165 = vcmask 97360
    %166 = vst.msk [vmem:[#allocation0] sm:$0x1] %vm165, %v164
    %s167 = scalar_lea.vmem %s0, 4
    %v168 = vld [vmem:[%s167] sm:$0x1]
    %169 = vrot.lane.b32.xlu0 %v168, 8
    %v170 = vpop.permute.xlu0 %169
    %vm171 = vcmask 80960
    %172 = vst.msk [vmem:[#allocation0] sm:$0x1] %vm171, %v170
    %s173 = scalar_lea.vmem %s0, 3
    %v174 = vld [vmem:[%s173] sm:$0x1]
    %175 = vrot.lane.b32.xlu0 %v174, 6
    %v176 = vpop.permute.xlu0 %175
    %vm177 = vcmask 64560
    %178 = vst.msk [vmem:[#allocation0] sm:$0x1] %vm177, %v176
    %s179 = scalar_lea.vmem %s0, 2
    %v180 = vld [vmem:[%s179] sm:$0x1]
    %181 = vrot.lane.b32.xlu0 %v180, 4
    %v182 = vpop.permute.xlu0 %181
    %vm183 = vcmask 48160
    %184 = vst.msk [vmem:[#allocation0] sm:$0x1] %vm183, %v182
    %s185 = scalar_lea.vmem %s0, 1
    %v186 = vld [vmem:[%s185] sm:$0x1]
    %187 = vrot.lane.b32.xlu0 %v186, 2
    %v188 = vpop.permute.xlu0 %187
    %vm189 = vcmask 31760
    %190 = vst.msk [vmem:[#allocation0] sm:$0x1] %vm189, %v188
    %s192 = ssub.s32 2, 1
    %v193 = vld [vmem:[#allocation0] sm:%s192]
    %s195 = ssub.s32 2, 1
    %196 = vst [vmem:[%s1] sm:%s195] %v193

// kernel: tile.33
$region0: #{tile.33}
  #allocation0 [shape = 's32[1]{0}', space=sflag, size = 0x4, scoped, tag = 'scoped memory for tile.33']
  %s0 = inlined_call_operand.vmem [shape: f32[8], index: 0, kind: input, shape index: {}]
  %s1 = inlined_call_operand.vmem [shape: f32[16,8], index: 1, kind: output, shape index: {}]
  // Predicated region
  $region2: #{tile.33} parent=0 // pred_check
    _
  $region3: #{tile.33} parent=0 // pred_check_branch
    %3 = sbr.rel (0) target = $region5
  $region4: #{tile.33} parent=0 // pred_region
    _
  $region5: #{tile.33} parent=0 // pred_fallthru
    _
  %v4 = vld [vmem:[%s0] ss:$0 sm:$0xff]
  %5 = vst [vmem:[%s1] sm:$0xff] %v4
  %s6 = scalar_lea.vmem %s1, 8
  %7 = vst [vmem:[%s6] sm:$0xff] %v4

// kernel: tile.34
$region0: #{tile.34}
  %s0 = inlined_call_operand.vmem [shape: f32[16,8], index: 0, kind: input, shape index: {}]
  %s1 = inlined_call_operand.vmem [shape: f32[1,128], index: 1, kind: output, shape index: {}]
  $region1: #{tile.34} parent=0
    #allocation0 [shape = 'u8[4096]{0}', space=vmem, size = 0x1000, scoped, tag = 'scoped mem for output reshape']
    %v2 = vld [vmem:[%s0] sm:$0x1]
    %vm3 = vcmask 64512
    %4 = vst.msk [vmem:[#allocation0] sm:$0x1] %vm3, %v2
    %s5 = scalar_lea.vmem %s0, 15
    %v6 = vld [vmem:[%s5] sm:$0x1]
    %7 = vrot.lane.b32.xlu0 %v6, 120
    %v8 = vpop.permute.xlu0 %7
    %vm9 = vcmask 1048512
    %10 = vst.msk [vmem:[#allocation0] sm:$0x1] %vm9, %v8
    %s11 = scalar_lea.vmem %s0, 14
    %v12 = vld [vmem:[%s11] sm:$0x1]
    %13 = vrot.lane.b32.xlu0 %v12, 112
    %v14 = vpop.permute.xlu0 %13
    %vm15 = vcmask 982912
    %16 = vst.msk [vmem:[#allocation0] sm:$0x1] %vm15, %v14
    %s17 = scalar_lea.vmem %s0, 13
    %v18 = vld [vmem:[%s17] sm:$0x1]
    %19 = vrot.lane.b32.xlu0 %v18, 104
    %v20 = vpop.permute.xlu0 %19
    %vm21 = vcmask 917312
    %22 = vst.msk [vmem:[#allocation0] sm:$0x1] %vm21, %v20
    %s23 = scalar_lea.vmem %s0, 12
    %v24 = vld [vmem:[%s23] sm:$0x1]
    %25 = vrot.lane.b32.xlu0 %v24, 96
    %v26 = vpop.permute.xlu0 %25
    %vm27 = vcmask 851712
    %28 = vst.msk [vmem:[#allocation0] sm:$0x1] %vm27, %v26
    %s29 = scalar_lea.vmem %s0, 11
    %v30 = vld [vmem:[%s29] sm:$0x1]
    %31 = vrot.lane.b32.xlu0 %v30, 88
    %v32 = vpop.permute.xlu0 %31
    %vm33 = vcmask 786112
    %34 = vst.msk [vmem:[#allocation0] sm:$0x1] %vm33, %v32
    %s35 = scalar_lea.vmem %s0, 10
    %v36 = vld [vmem:[%s35] sm:$0x1]
    %37 = vrot.lane.b32.xlu0 %v36, 80
    %v38 = vpop.permute.xlu0 %37
    %vm39 = vcmask 720512
    %40 = vst.msk [vmem:[#allocation0] sm:$0x1] %vm39, %v38
    %s41 = scalar_lea.vmem %s0, 9
    %v42 = vld [vmem:[%s41] sm:$0x1]
    %43 = vrot.lane.b32.xlu0 %v42, 72
    %v44 = vpop.permute.xlu0 %43
    %vm45 = vcmask 654912
    %46 = vst.msk [vmem:[#allocation0] sm:$0x1] %vm45, %v44
    %s47 = scalar_lea.vmem %s0, 8
    %v48 = vld [vmem:[%s47] sm:$0x1]
    %49 = vrot.lane.b32.xlu0 %v48, 64
    %v50 = vpop.permute.xlu0 %49
    %vm51 = vcmask 589312
    %52 = vst.msk [vmem:[#allocation0] sm:$0x1] %vm51, %v50
    %s53 = scalar_lea.vmem %s0, 7
    %v54 = vld [vmem:[%s53] sm:$0x1]
    %55 = vrot.lane.b32.xlu0 %v54, 56
    %v56 = vpop.permute.xlu0 %55
    %vm57 = vcmask 523712
    %58 = vst.msk [vmem:[#allocation0] sm:$0x1] %vm57, %v56
    %s59 = scalar_lea.vmem %s0, 6
    %v60 = vld [vmem:[%s59] sm:$0x1]
    %61 = vrot.lane.b32.xlu0 %v60, 48
    %v62 = vpop.permute.xlu0 %61
    %vm63 = vcmask 458112
    %64 = vst.msk [vmem:[#allocation0] sm:$0x1] %vm63, %v62
    %s65 = scalar_lea.vmem %s0, 5
    %v66 = vld [vmem:[%s65] sm:$0x1]
    %67 = vrot.lane.b32.xlu0 %v66, 40
    %v68 = vpop.permute.xlu0 %67
    %vm69 = vcmask 392512
    %70 = vst.msk [vmem:[#allocation0] sm:$0x1] %vm69, %v68
    %s71 = scalar_lea.vmem %s0, 4
    %v72 = vld [vmem:[%s71] sm:$0x1]
    %73 = vrot.lane.b32.xlu0 %v72, 32
    %v74 = vpop.permute.xlu0 %73
    %vm75 = vcmask 326912
    %76 = vst.msk [vmem:[#allocation0] sm:$0x1] %vm75, %v74
    %s77 = scalar_lea.vmem %s0, 3
    %v78 = vld [vmem:[%s77] sm:$0x1]
    %79 = vrot.lane.b32.xlu0 %v78, 24
    %v80 = vpop.permute.xlu0 %79
    %vm81 = vcmask 261312
    %82 = vst.msk [vmem:[#allocation0] sm:$0x1] %vm81, %v80
    %s83 = scalar_lea.vmem %s0, 2
    %v84 = vld [vmem:[%s83] sm:$0x1]
    %85 = vrot.lane.b32.xlu0 %v84, 16
    %v86 = vpop.permute.xlu0 %85
    %vm87 = vcmask 195712
    %88 = vst.msk [vmem:[#allocation0] sm:$0x1] %vm87, %v86
    %s89 = scalar_lea.vmem %s0, 1
    %v90 = vld [vmem:[%s89] sm:$0x1]
    %91 = vrot.lane.b32.xlu0 %v90, 8
    %v92 = vpop.permute.xlu0 %91
    %vm93 = vcmask 130112
    %94 = vst.msk [vmem:[#allocation0] sm:$0x1] %vm93, %v92
    %s96 = ssub.s32 2, 1
    %v97 = vld [vmem:[#allocation0] sm:%s96]
    %s99 = ssub.s32 2, 1
    %100 = vst [vmem:[%s1] sm:%s99] %v97

// kernel: up_forward.2
$region0: #{up_forward.2}
  #allocation0 [shape = 'u32[]', space=smem, size = 0x4, offset = 0x4, fixed_abs, tag = 'smem constant byte address 0x4 - core index']
  #allocation1 [shape = 'u32[72,128]{1,0:T(1,128)}', space=vmem, size = 0x9000, scoped, tag = 'internal scratch']
  %s0 = inlined_call_operand.vmem [shape: f32[16,32], index: 0, kind: input, shape index: {}]
  %s1 = inlined_call_operand.vmem [shape: f32[32,64], index: 1, kind: input, shape index: {}]
  %s2 = inlined_call_operand.vmem [shape: f32[1,64], index: 2, kind: input, shape index: {}]
  %s3 = inlined_call_operand.vmem [shape: f32[16,64], index: 3, kind: output, shape index: {}]
  %s4 = sld [smem:[#allocation0]]
  $region22: #{up_forward.2} parent=0
    _
  %s6 = ssub.s32 1, %s4
  %s7 = scalar_select 0, %s6, %s4
  // Predicated region
  $region2: #{up_forward.2} parent=0 // pred_check
    _
  $region3: #{up_forward.2} parent=0 // pred_check_branch
    %9 = sbr.rel (0) target = $region5
  $region4: #{up_forward.2} parent=0 // pred_region
    _
  $region5: #{up_forward.2} parent=0 // pred_fallthru
    _
  // Predicated region
  $region6: #{up_forward.2} parent=0 // pred_check
    _
  $region7: #{up_forward.2} parent=0 // pred_check_branch
    %11 = sbr.rel (0) target = $region9
  $region8: #{up_forward.2} parent=0 // pred_region
    _
  $region9: #{up_forward.2} parent=0 // pred_fallthru
    _
  // Predicated region
  $region10: #{up_forward.2} parent=0 // pred_check
    _
  $region11: #{up_forward.2} parent=0 // pred_check_branch
    %13 = sbr.rel (0) target = $region13
  $region12: #{up_forward.2} parent=0 // pred_region
    _
  $region13: #{up_forward.2} parent=0 // pred_fallthru
    _
  %v14 = vld [vmem:[%s0] sm:$0xff]
  %v15 = vld [vmem:[%s0 + $0x8] sm:$0xff]
  %v16 = vld [vmem:[%s1] sm:$0xff]
  %v17 = vld [vmem:[%s1 + $0x8] sm:$0xff]
  %v18 = vld [vmem:[%s1 + $0x10] sm:$0xff]
  %v19 = vld [vmem:[%s1 + $0x18] sm:$0xff]
  %v20 = vld [vmem:[%s2] sm:$0x1]
  %v22 = vperm.slane %v20, 0
  %vm24 = vcmask 261120
  %v26 = vsel %vm24, %v14, 0
  %v29 = vsel %vm24, %v15, 0
  %31 = vmatpush.msra.mxu0 0.0
  %32 = vmatpush.msra.mxu0 0.0
  %33 = vmatpush.msra.mxu0 0.0
  %34 = vmatpush.msra.mxu0 0.0
  %35 = vmatpush.msra.mxu0 0.0
  %36 = vmatpush.msra.mxu0 0.0
  %37 = vmatpush.msra.mxu0 0.0
  %38 = vmatpush.msra.mxu0 0.0
  %39 = vmatpush.msra.mxu0 0.0
  %40 = vmatpush.msra.mxu0 0.0
  %41 = vmatpush.msra.mxu0 0.0
  %42 = vmatpush.msra.mxu0 0.0
  %43 = vmatpush.msra.mxu0 %v19
  %44 = vmatpush.msra.mxu0 %v18
  %45 = vmatpush.msra.mxu0 %v17
  %46 = vmatpush.msra.mxu0 %v16
  %47 = vmatmul.f32.gmra.mxu0 %v26
  %v48 = vpop.f32.mrf.mxu0
  %v49 = vadd.f32 %v22, %v48
  %50 = vmatmul.f32.gmra.mxu0 %v29
  %v51 = vpop.f32.mrf.mxu0
  %v52 = vadd.f32 %v22, %v51
  %53 = vdwg.mxu0
  %vm54 = vcmask 523264
  %55 = vst.msk [vmem:[%s3] sm:$0xff] %vm54, %v49
  %56 = vst.msk [vmem:[%s3 + $0x8] sm:$0xff] %vm54, %v52
  // Predicated region
  $region14: #{up_forward.2} parent=0 // pred_check
    _
  $region15: #{up_forward.2} parent=0 // pred_check_branch
    %58 = sbr.rel (0) target = $region17
  $region16: #{up_forward.2} parent=0 // pred_region
    _
  $region17: #{up_forward.2} parent=0 // pred_fallthru
    _
  // Predicated region
  $region18: #{up_forward.2} parent=0 // pred_check
    _
  $region19: #{up_forward.2} parent=0 // pred_check_branch
    %60 = sbr.rel (0) target = $region21
  $region20: #{up_forward.2} parent=0 // pred_region
    _
  $region21: #{up_forward.2} parent=0 // pred_fallthru
    _

// kernel: up_forward.3
$region0: #{up_forward.3}
  #allocation0 [shape = 'u32[]', space=smem, size = 0x4, offset = 0x4, fixed_abs, tag = 'smem constant byte address 0x4 - core index']
  #allocation1 [shape = 'u32[72,128]{1,0:T(1,128)}', space=vmem, size = 0x9000, scoped, tag = 'internal scratch']
  #allocation2 [shape = 'f32[2,18,32]{2,1,0:T(8,128)}', space=vmem, size = 0x6000, scoped, tag = 'scratch operand']
  #allocation3 [shape = 'f32[2,18,32]{2,1,0:T(8,128)}', space=vmem, size = 0x6000, scoped, tag = 'scratch operand']
  #allocation4 [shape = 'f32[2,16,128]{2,1,0:T(8,128)}', space=vmem, size = 0x4000, scoped, tag = 'scratch operand']
  #allocation5 [shape = 'f32[2,18,128]{2,1,0:T(8,128)}', space=vmem, size = 0x6000, scoped, tag = 'scratch operand']
  %s0 = inlined_call_operand.vmem [shape: f32[2,16,32], index: 0, kind: input, shape index: {}]
  %s1 = inlined_call_operand.vmem [shape: f32[2,16,32], index: 1, kind: input, shape index: {}]
  %s2 = inlined_call_operand.vmem [shape: f32[3,32,128], index: 2, kind: input, shape index: {}]
  %s3 = inlined_call_operand.vmem [shape: f32[3,32,128], index: 3, kind: input, shape index: {}]
  %s4 = inlined_call_operand.vmem [shape: f32[3,128,128], index: 4, kind: input, shape index: {}]
  %s5 = inlined_call_operand.vmem [shape: f32[1,128], index: 5, kind: input, shape index: {}]
  %s6 = inlined_call_operand.vmem [shape: f32[1,128], index: 6, kind: input, shape index: {}]
  %s7 = inlined_call_operand.vmem [shape: f32[1,128], index: 7, kind: input, shape index: {}]
  %s8 = inlined_call_operand.vmem [shape: f32[1,128], index: 8, kind: input, shape index: {}]
  %s9 = inlined_call_operand.vmem [shape: f32[128,128], index: 9, kind: input, shape index: {}]
  %s10 = inlined_call_operand.vmem [shape: f32[2,16,128], index: 10, kind: output, shape index: {}]
  %s11 = sld [smem:[#allocation0]]
  $region50: #{up_forward.3} parent=0
    _
  %s13 = ssub.s32 1, %s11
  %s14 = scalar_select 0, %s13, %s11
  // Predicated region
  $region2: #{up_forward.3} parent=0 // pred_check
    _
  $region3: #{up_forward.3} parent=0 // pred_check_branch
    %16 = sbr.rel (0) target = $region5
  $region4: #{up_forward.3} parent=0 // pred_region
    _
  $region5: #{up_forward.3} parent=0 // pred_fallthru
    _
  // Predicated region
  $region6: #{up_forward.3} parent=0 // pred_check
    _
  $region7: #{up_forward.3} parent=0 // pred_check_branch
    %18 = sbr.rel (0) target = $region9
  $region8: #{up_forward.3} parent=0 // pred_region
    _
  $region9: #{up_forward.3} parent=0 // pred_fallthru
    _
  // Predicated region
  $region10: #{up_forward.3} parent=0 // pred_check
    _
  $region11: #{up_forward.3} parent=0 // pred_check_branch
    %20 = sbr.rel (0) target = $region13
  $region12: #{up_forward.3} parent=0 // pred_region
    _
  $region13: #{up_forward.3} parent=0 // pred_fallthru
    _
  // Predicated region
  $region14: #{up_forward.3} parent=0 // pred_check
    _
  $region15: #{up_forward.3} parent=0 // pred_check_branch
    %22 = sbr.rel (0) target = $region17
  $region16: #{up_forward.3} parent=0 // pred_region
    _
  $region17: #{up_forward.3} parent=0 // pred_fallthru
    _
  // Predicated region
  $region18: #{up_forward.3} parent=0 // pred_check
    _
  $region19: #{up_forward.3} parent=0 // pred_check_branch
    %24 = sbr.rel (0) target = $region21
  $region20: #{up_forward.3} parent=0 // pred_region
    _
  $region21: #{up_forward.3} parent=0 // pred_fallthru
    _
  // Predicated region
  $region22: #{up_forward.3} parent=0 // pred_check
    _
  $region23: #{up_forward.3} parent=0 // pred_check_branch
    %26 = sbr.rel (0) target = $region25
  $region24: #{up_forward.3} parent=0 // pred_region
    _
  $region25: #{up_forward.3} parent=0 // pred_fallthru
    _
  // Predicated region
  $region26: #{up_forward.3} parent=0 // pred_check
    _
  $region27: #{up_forward.3} parent=0 // pred_check_branch
    %28 = sbr.rel (0) target = $region29
  $region28: #{up_forward.3} parent=0 // pred_region
    _
  $region29: #{up_forward.3} parent=0 // pred_fallthru
    _
  // Predicated region
  $region30: #{up_forward.3} parent=0 // pred_check
    _
  $region31: #{up_forward.3} parent=0 // pred_check_branch
    %30 = sbr.rel (0) target = $region33
  $region32: #{up_forward.3} parent=0 // pred_region
    _
  $region33: #{up_forward.3} parent=0 // pred_fallthru
    _
  // Predicated region
  $region34: #{up_forward.3} parent=0 // pred_check
    _
  $region35: #{up_forward.3} parent=0 // pred_check_branch
    %32 = sbr.rel (0) target = $region37
  $region36: #{up_forward.3} parent=0 // pred_region
    _
  $region37: #{up_forward.3} parent=0 // pred_fallthru
    _
  // Predicated region
  $region38: #{up_forward.3} parent=0 // pred_check
    _
  $region39: #{up_forward.3} parent=0 // pred_check_branch
    %34 = sbr.rel (0) target = $region41
  $region40: #{up_forward.3} parent=0 // pred_region
    _
  $region41: #{up_forward.3} parent=0 // pred_fallthru
    _
  %vm35 = vcmask 261120
  %36 = vst.msk [vmem:[#allocation2] sm:$0xff] %vm35, 0.0
  %37 = vst.msk [vmem:[#allocation2 + $0x8] sm:$0xff] %vm35, 0.0
  %vm38 = vcmask 254976
  %39 = vst.msk [vmem:[#allocation2 + $0x10] sm:$0x3] %vm38, 0.0
  %40 = vst.msk [vmem:[#allocation2 + $0x18] sm:$0xff] %vm35, 0.0
  %41 = vst.msk [vmem:[#allocation2 + $0x20] sm:$0xff] %vm35, 0.0
  %42 = vst.msk [vmem:[#allocation2 + $0x28] sm:$0x3] %vm38, 0.0
  %43 = vst.msk [vmem:[#allocation3] sm:$0xff] %vm35, 0.0
  %44 = vst.msk [vmem:[#allocation3 + $0x8] sm:$0xff] %vm35, 0.0
  %45 = vst.msk [vmem:[#allocation3 + $0x10] sm:$0x3] %vm38, 0.0
  %46 = vst.msk [vmem:[#allocation3 + $0x18] sm:$0xff] %vm35, 0.0
  %47 = vst.msk [vmem:[#allocation3 + $0x20] sm:$0xff] %vm35, 0.0
  %48 = vst.msk [vmem:[#allocation3 + $0x28] sm:$0x3] %vm38, 0.0
  %v49 = vld [vmem:[%s0] sm:$0xff]
  %v50 = vld [vmem:[%s0 + $0x8] sm:$0xff]
  %v51 = vld [vmem:[%s0 + $0x10] sm:$0xff]
  %v52 = vld [vmem:[%s0 + $0x18] sm:$0xff]
  %53 = vst.msk [vmem:[#allocation2 + $0x1] sm:$0xff] %vm35, %v49
  %54 = vst.msk [vmem:[#allocation2 + $0x9] sm:$0xff] %vm35, %v50
  %55 = vst.msk [vmem:[#allocation2 + $0x19] sm:$0xff] %vm35, %v51
  %56 = vst.msk [vmem:[#allocation2 + $0x21] sm:$0xff] %vm35, %v52
  %v57 = vld [vmem:[%s1] sm:$0xff]
  %v58 = vld [vmem:[%s1 + $0x8] sm:$0xff]
  %v59 = vld [vmem:[%s1 + $0x10] sm:$0xff]
  %v60 = vld [vmem:[%s1 + $0x18] sm:$0xff]
  %61 = vst.msk [vmem:[#allocation3 + $0x1] sm:$0xff] %vm35, %v57
  %62 = vst.msk [vmem:[#allocation3 + $0x9] sm:$0xff] %vm35, %v58
  %63 = vst.msk [vmem:[#allocation3 + $0x19] sm:$0xff] %vm35, %v59
  %64 = vst.msk [vmem:[#allocation3 + $0x21] sm:$0xff] %vm35, %v60
  %v65 = vld [vmem:[#allocation2] sm:$0xff]
  %v66 = vld [vmem:[#allocation2 + $0x8] sm:$0xff]
  %v67 = vld [vmem:[%s2] sm:$0xff]
  %v68 = vld [vmem:[%s2 + $0x8] sm:$0xff]
  %v69 = vld [vmem:[%s2 + $0x10] sm:$0xff]
  %v70 = vld [vmem:[%s2 + $0x18] sm:$0xff]
  %v71 = vld [vmem:[#allocation2 + $0x1] sm:$0xff]
  %v72 = vld [vmem:[#allocation2 + $0x9] sm:$0xff]
  %s73 = scalar_lea.vmem %s2, 32
  %v74 = vld [vmem:[%s73] sm:$0xff]
  %v75 = vld [vmem:[%s73 + $0x8] sm:$0xff]
  %v76 = vld [vmem:[%s73 + $0x10] sm:$0xff]
  %v77 = vld [vmem:[%s73 + $0x18] sm:$0xff]
  %v79 = vsel %vm35, %v71, 0
  %v82 = vsel %vm35, %v72, 0
  %84 = vmatpush.msra.mxu0 0.0
  %85 = vmatpush.msra.mxu0 0.0
  %86 = vmatpush.msra.mxu0 0.0
  %87 = vmatpush.msra.mxu0 0.0
  %88 = vmatpush.msra.mxu0 0.0
  %89 = vmatpush.msra.mxu0 0.0
  %90 = vmatpush.msra.mxu0 0.0
  %91 = vmatpush.msra.mxu0 0.0
  %92 = vmatpush.msra.mxu0 0.0
  %93 = vmatpush.msra.mxu0 0.0
  %94 = vmatpush.msra.mxu0 0.0
  %95 = vmatpush.msra.mxu0 0.0
  %96 = vmatpush.msra.mxu0 %v77
  %97 = vmatpush.msra.mxu0 %v76
  %98 = vmatpush.msra.mxu0 %v75
  %99 = vmatpush.msra.mxu0 %v74
  %100 = vmatmul.f32.gmra.mxu0 %v79
  %v101 = vpop.f32.mrf.mxu0
  %v102 = vadd.f32 0.0, %v101
  %103 = vmatmul.f32.gmra.mxu0 %v82
  %v104 = vpop.f32.mrf.mxu0
  %v105 = vadd.f32 0.0, %v104
  %106 = vdwg.mxu0
  %v108 = vsel %vm35, %v65, 0
  %v111 = vsel %vm35, %v66, 0
  %113 = vmatpush.msra.mxu0 0.0
  %114 = vmatpush.msra.mxu0 0.0
  %115 = vmatpush.msra.mxu0 0.0
  %116 = vmatpush.msra.mxu0 0.0
  %117 = vmatpush.msra.mxu0 0.0
  %118 = vmatpush.msra.mxu0 0.0
  %119 = vmatpush.msra.mxu0 0.0
  %120 = vmatpush.msra.mxu0 0.0
  %121 = vmatpush.msra.mxu0 0.0
  %122 = vmatpush.msra.mxu0 0.0
  %123 = vmatpush.msra.mxu0 0.0
  %124 = vmatpush.msra.mxu0 0.0
  %125 = vmatpush.msra.mxu0 %v70
  %126 = vmatpush.msra.mxu0 %v69
  %127 = vmatpush.msra.mxu0 %v68
  %128 = vmatpush.msra.mxu0 %v67
  %129 = vmatmul.f32.gmra.mxu0 %v108
  %v130 = vpop.f32.mrf.mxu0
  %v131 = vadd.f32 %v102, %v130
  %132 = vmatmul.f32.gmra.mxu0 %v111
  %v133 = vpop.f32.mrf.mxu0
  %v134 = vadd.f32 %v105, %v133
  %135 = vdwg.mxu0
  %v136 = vld [vmem:[#allocation2 + $0x2] sm:$0xff]
  %v137 = vld [vmem:[#allocation2 + $0xa] sm:$0xff]
  %s138 = scalar_lea.vmem %s2, 64
  %v139 = vld [vmem:[%s138] sm:$0xff]
  %v140 = vld [vmem:[%s138 + $0x8] sm:$0xff]
  %v141 = vld [vmem:[%s138 + $0x10] sm:$0xff]
  %v142 = vld [vmem:[%s138 + $0x18] sm:$0xff]
  %v144 = vsel %vm35, %v136, 0
  %v147 = vsel %vm35, %v137, 0
  %149 = vmatpush.msra.mxu0 0.0
  %150 = vmatpush.msra.mxu0 0.0
  %151 = vmatpush.msra.mxu0 0.0
  %152 = vmatpush.msra.mxu0 0.0
  %153 = vmatpush.msra.mxu0 0.0
  %154 = vmatpush.msra.mxu0 0.0
  %155 = vmatpush.msra.mxu0 0.0
  %156 = vmatpush.msra.mxu0 0.0
  %157 = vmatpush.msra.mxu0 0.0
  %158 = vmatpush.msra.mxu0 0.0
  %159 = vmatpush.msra.mxu0 0.0
  %160 = vmatpush.msra.mxu0 0.0
  %161 = vmatpush.msra.mxu0 %v142
  %162 = vmatpush.msra.mxu0 %v141
  %163 = vmatpush.msra.mxu0 %v140
  %164 = vmatpush.msra.mxu0 %v139
  %165 = vmatmul.f32.gmra.mxu0 %v144
  %v166 = vpop.f32.mrf.mxu0
  %v167 = vadd.f32 0.0, %v166
  %168 = vmatmul.f32.gmra.mxu0 %v147
  %v169 = vpop.f32.mrf.mxu0
  %v170 = vadd.f32 0.0, %v169
  %171 = vdwg.mxu0
  %v172 = vadd.f32 %v131, %v167
  %v173 = vadd.f32 %v134, %v170
  %v174 = vld [vmem:[#allocation3] sm:$0xff]
  %v175 = vld [vmem:[#allocation3 + $0x8] sm:$0xff]
  %v176 = vld [vmem:[%s3] sm:$0xff]
  %v177 = vld [vmem:[%s3 + $0x8] sm:$0xff]
  %v178 = vld [vmem:[%s3 + $0x10] sm:$0xff]
  %v179 = vld [vmem:[%s3 + $0x18] sm:$0xff]
  %v181 = vsel %vm35, %v174, 0
  %v184 = vsel %vm35, %v175, 0
  %186 = vmatpush.msra.mxu0 0.0
  %187 = vmatpush.msra.mxu0 0.0
  %188 = vmatpush.msra.mxu0 0.0
  %189 = vmatpush.msra.mxu0 0.0
  %190 = vmatpush.msra.mxu0 0.0
  %191 = vmatpush.msra.mxu0 0.0
  %192 = vmatpush.msra.mxu0 0.0
  %193 = vmatpush.msra.mxu0 0.0
  %194 = vmatpush.msra.mxu0 0.0
  %195 = vmatpush.msra.mxu0 0.0
  %196 = vmatpush.msra.mxu0 0.0
  %197 = vmatpush.msra.mxu0 0.0
  %198 = vmatpush.msra.mxu0 %v179
  %199 = vmatpush.msra.mxu0 %v178
  %200 = vmatpush.msra.mxu0 %v177
  %201 = vmatpush.msra.mxu0 %v176
  %202 = vmatmul.f32.gmra.mxu0 %v181
  %v203 = vpop.f32.mrf.mxu0
  %v204 = vadd.f32 0.0, %v203
  %205 = vmatmul.f32.gmra.mxu0 %v184
  %v206 = vpop.f32.mrf.mxu0
  %v207 = vadd.f32 0.0, %v206
  %208 = vdwg.mxu0
  %v209 = vadd.f32 %v172, %v204
  %v210 = vadd.f32 %v173, %v207
  %v211 = vld [vmem:[#allocation3 + $0x1] sm:$0xff]
  %v212 = vld [vmem:[#allocation3 + $0x9] sm:$0xff]
  %s213 = scalar_lea.vmem %s3, 32
  %v214 = vld [vmem:[%s213] sm:$0xff]
  %v215 = vld [vmem:[%s213 + $0x8] sm:$0xff]
  %v216 = vld [vmem:[%s213 + $0x10] sm:$0xff]
  %v217 = vld [vmem:[%s213 + $0x18] sm:$0xff]
  %v219 = vsel %vm35, %v211, 0
  %v222 = vsel %vm35, %v212, 0
  %224 = vmatpush.msra.mxu0 0.0
  %225 = vmatpush.msra.mxu0 0.0
  %226 = vmatpush.msra.mxu0 0.0
  %227 = vmatpush.msra.mxu0 0.0
  %228 = vmatpush.msra.mxu0 0.0
  %229 = vmatpush.msra.mxu0 0.0
  %230 = vmatpush.msra.mxu0 0.0
  %231 = vmatpush.msra.mxu0 0.0
  %232 = vmatpush.msra.mxu0 0.0
  %233 = vmatpush.msra.mxu0 0.0
  %234 = vmatpush.msra.mxu0 0.0
  %235 = vmatpush.msra.mxu0 0.0
  %236 = vmatpush.msra.mxu0 %v217
  %237 = vmatpush.msra.mxu0 %v216
  %238 = vmatpush.msra.mxu0 %v215
  %239 = vmatpush.msra.mxu0 %v214
  %240 = vmatmul.f32.gmra.mxu0 %v219
  %v241 = vpop.f32.mrf.mxu0
  %v242 = vadd.f32 0.0, %v241
  %243 = vmatmul.f32.gmra.mxu0 %v222
  %v244 = vpop.f32.mrf.mxu0
  %v245 = vadd.f32 0.0, %v244
  %246 = vdwg.mxu0
  %v247 = vadd.f32 %v209, %v242
  %v248 = vadd.f32 %v210, %v245
  %v249 = vld [vmem:[#allocation3 + $0x2] sm:$0xff]
  %v250 = vld [vmem:[#allocation3 + $0xa] sm:$0xff]
  %s251 = scalar_lea.vmem %s3, 64
  %v252 = vld [vmem:[%s251] sm:$0xff]
  %v253 = vld [vmem:[%s251 + $0x8] sm:$0xff]
  %v254 = vld [vmem:[%s251 + $0x10] sm:$0xff]
  %v255 = vld [vmem:[%s251 + $0x18] sm:$0xff]
  %v257 = vsel %vm35, %v249, 0
  %v260 = vsel %vm35, %v250, 0
  %262 = vmatpush.msra.mxu0 0.0
  %263 = vmatpush.msra.mxu0 0.0
  %264 = vmatpush.msra.mxu0 0.0
  %265 = vmatpush.msra.mxu0 0.0
  %266 = vmatpush.msra.mxu0 0.0
  %267 = vmatpush.msra.mxu0 0.0
  %268 = vmatpush.msra.mxu0 0.0
  %269 = vmatpush.msra.mxu0 0.0
  %270 = vmatpush.msra.mxu0 0.0
  %271 = vmatpush.msra.mxu0 0.0
  %272 = vmatpush.msra.mxu0 0.0
  %273 = vmatpush.msra.mxu0 0.0
  %274 = vmatpush.msra.mxu0 %v255
  %275 = vmatpush.msra.mxu0 %v254
  %276 = vmatpush.msra.mxu0 %v253
  %277 = vmatpush.msra.mxu0 %v252
  %278 = vmatmul.f32.gmra.mxu0 %v257
  %v279 = vpop.f32.mrf.mxu0
  %v280 = vadd.f32 0.0, %v279
  %281 = vmatmul.f32.gmra.mxu0 %v260
  %v282 = vpop.f32.mrf.mxu0
  %v283 = vadd.f32 0.0, %v282
  %284 = vdwg.mxu0
  %v285 = vadd.f32 %v247, %v280
  %v286 = vadd.f32 %v248, %v283
  %287 = vst [vmem:[#allocation4] sm:$0xff] %v285
  %288 = vst [vmem:[#allocation4 + $0x8] sm:$0xff] %v286
  %s289 = scalar_lea.vmem [#allocation2], 24
  %v290 = vld [vmem:[%s289] sm:$0xff]
  %v291 = vld [vmem:[%s289 + $0x8] sm:$0xff]
  %v292 = vld [vmem:[%s2] sm:$0xff]
  %v293 = vld [vmem:[%s2 + $0x8] sm:$0xff]
  %v294 = vld [vmem:[%s2 + $0x10] sm:$0xff]
  %v295 = vld [vmem:[%s2 + $0x18] sm:$0xff]
  %v296 = vld [vmem:[%s289 + $0x1] sm:$0xff]
  %v297 = vld [vmem:[%s289 + $0x9] sm:$0xff]
  %v298 = vld [vmem:[%s73] sm:$0xff]
  %v299 = vld [vmem:[%s73 + $0x8] sm:$0xff]
  %v300 = vld [vmem:[%s73 + $0x10] sm:$0xff]
  %v301 = vld [vmem:[%s73 + $0x18] sm:$0xff]
  %v303 = vsel %vm35, %v296, 0
  %v306 = vsel %vm35, %v297, 0
  %308 = vmatpush.msra.mxu0 0.0
  %309 = vmatpush.msra.mxu0 0.0
  %310 = vmatpush.msra.mxu0 0.0
  %311 = vmatpush.msra.mxu0 0.0
  %312 = vmatpush.msra.mxu0 0.0
  %313 = vmatpush.msra.mxu0 0.0
  %314 = vmatpush.msra.mxu0 0.0
  %315 = vmatpush.msra.mxu0 0.0
  %316 = vmatpush.msra.mxu0 0.0
  %317 = vmatpush.msra.mxu0 0.0
  %318 = vmatpush.msra.mxu0 0.0
  %319 = vmatpush.msra.mxu0 0.0
  %320 = vmatpush.msra.mxu0 %v301
  %321 = vmatpush.msra.mxu0 %v300
  %322 = vmatpush.msra.mxu0 %v299
  %323 = vmatpush.msra.mxu0 %v298
  %324 = vmatmul.f32.gmra.mxu0 %v303
  %v325 = vpop.f32.mrf.mxu0
  %v326 = vadd.f32 0.0, %v325
  %327 = vmatmul.f32.gmra.mxu0 %v306
  %v328 = vpop.f32.mrf.mxu0
  %v329 = vadd.f32 0.0, %v328
  %330 = vdwg.mxu0
  %v332 = vsel %vm35, %v290, 0
  %v335 = vsel %vm35, %v291, 0
  %337 = vmatpush.msra.mxu0 0.0
  %338 = vmatpush.msra.mxu0 0.0
  %339 = vmatpush.msra.mxu0 0.0
  %340 = vmatpush.msra.mxu0 0.0
  %341 = vmatpush.msra.mxu0 0.0
  %342 = vmatpush.msra.mxu0 0.0
  %343 = vmatpush.msra.mxu0 0.0
  %344 = vmatpush.msra.mxu0 0.0
  %345 = vmatpush.msra.mxu0 0.0
  %346 = vmatpush.msra.mxu0 0.0
  %347 = vmatpush.msra.mxu0 0.0
  %348 = vmatpush.msra.mxu0 0.0
  %349 = vmatpush.msra.mxu0 %v295
  %350 = vmatpush.msra.mxu0 %v294
  %351 = vmatpush.msra.mxu0 %v293
  %352 = vmatpush.msra.mxu0 %v292
  %353 = vmatmul.f32.gmra.mxu0 %v332
  %v354 = vpop.f32.mrf.mxu0
  %v355 = vadd.f32 %v326, %v354
  %356 = vmatmul.f32.gmra.mxu0 %v335
  %v357 = vpop.f32.mrf.mxu0
  %v358 = vadd.f32 %v329, %v357
  %359 = vdwg.mxu0
  %v360 = vld [vmem:[%s289 + $0x2] sm:$0xff]
  %v361 = vld [vmem:[%s289 + $0xa] sm:$0xff]
  %v362 = vld [vmem:[%s138] sm:$0xff]
  %v363 = vld [vmem:[%s138 + $0x8] sm:$0xff]
  %v364 = vld [vmem:[%s138 + $0x10] sm:$0xff]
  %v365 = vld [vmem:[%s138 + $0x18] sm:$0xff]
  %v367 = vsel %vm35, %v360, 0
  %v370 = vsel %vm35, %v361, 0
  %372 = vmatpush.msra.mxu0 0.0
  %373 = vmatpush.msra.mxu0 0.0
  %374 = vmatpush.msra.mxu0 0.0
  %375 = vmatpush.msra.mxu0 0.0
  %376 = vmatpush.msra.mxu0 0.0
  %377 = vmatpush.msra.mxu0 0.0
  %378 = vmatpush.msra.mxu0 0.0
  %379 = vmatpush.msra.mxu0 0.0
  %380 = vmatpush.msra.mxu0 0.0
  %381 = vmatpush.msra.mxu0 0.0
  %382 = vmatpush.msra.mxu0 0.0
  %383 = vmatpush.msra.mxu0 0.0
  %384 = vmatpush.msra.mxu0 %v365
  %385 = vmatpush.msra.mxu0 %v364
  %386 = vmatpush.msra.mxu0 %v363
  %387 = vmatpush.msra.mxu0 %v362
  %388 = vmatmul.f32.gmra.mxu0 %v367
  %v389 = vpop.f32.mrf.mxu0
  %v390 = vadd.f32 0.0, %v389
  %391 = vmatmul.f32.gmra.mxu0 %v370
  %v392 = vpop.f32.mrf.mxu0
  %v393 = vadd.f32 0.0, %v392
  %394 = vdwg.mxu0
  %v395 = vadd.f32 %v355, %v390
  %v396 = vadd.f32 %v358, %v393
  %s397 = scalar_lea.vmem [#allocation3], 24
  %v398 = vld [vmem:[%s397] sm:$0xff]
  %v399 = vld [vmem:[%s397 + $0x8] sm:$0xff]
  %v400 = vld [vmem:[%s3] sm:$0xff]
  %v401 = vld [vmem:[%s3 + $0x8] sm:$0xff]
  %v402 = vld [vmem:[%s3 + $0x10] sm:$0xff]
  %v403 = vld [vmem:[%s3 + $0x18] sm:$0xff]
  %v405 = vsel %vm35, %v398, 0
  %v408 = vsel %vm35, %v399, 0
  %410 = vmatpush.msra.mxu0 0.0
  %411 = vmatpush.msra.mxu0 0.0
  %412 = vmatpush.msra.mxu0 0.0
  %413 = vmatpush.msra.mxu0 0.0
  %414 = vmatpush.msra.mxu0 0.0
  %415 = vmatpush.msra.mxu0 0.0
  %416 = vmatpush.msra.mxu0 0.0
  %417 = vmatpush.msra.mxu0 0.0
  %418 = vmatpush.msra.mxu0 0.0
  %419 = vmatpush.msra.mxu0 0.0
  %420 = vmatpush.msra.mxu0 0.0
  %421 = vmatpush.msra.mxu0 0.0
  %422 = vmatpush.msra.mxu0 %v403
  %423 = vmatpush.msra.mxu0 %v402
  %424 = vmatpush.msra.mxu0 %v401
  %425 = vmatpush.msra.mxu0 %v400
  %426 = vmatmul.f32.gmra.mxu0 %v405
  %v427 = vpop.f32.mrf.mxu0
  %v428 = vadd.f32 0.0, %v427
  %429 = vmatmul.f32.gmra.mxu0 %v408
  %v430 = vpop.f32.mrf.mxu0
  %v431 = vadd.f32 0.0, %v430
  %432 = vdwg.mxu0
  %v433 = vadd.f32 %v395, %v428
  %v434 = vadd.f32 %v396, %v431
  %v435 = vld [vmem:[%s397 + $0x1] sm:$0xff]
  %v436 = vld [vmem:[%s397 + $0x9] sm:$0xff]
  %v437 = vld [vmem:[%s213] sm:$0xff]
  %v438 = vld [vmem:[%s213 + $0x8] sm:$0xff]
  %v439 = vld [vmem:[%s213 + $0x10] sm:$0xff]
  %v440 = vld [vmem:[%s213 + $0x18] sm:$0xff]
  %v442 = vsel %vm35, %v435, 0
  %v445 = vsel %vm35, %v436, 0
  %447 = vmatpush.msra.mxu0 0.0
  %448 = vmatpush.msra.mxu0 0.0
  %449 = vmatpush.msra.mxu0 0.0
  %450 = vmatpush.msra.mxu0 0.0
  %451 = vmatpush.msra.mxu0 0.0
  %452 = vmatpush.msra.mxu0 0.0
  %453 = vmatpush.msra.mxu0 0.0
  %454 = vmatpush.msra.mxu0 0.0
  %455 = vmatpush.msra.mxu0 0.0
  %456 = vmatpush.msra.mxu0 0.0
  %457 = vmatpush.msra.mxu0 0.0
  %458 = vmatpush.msra.mxu0 0.0
  %459 = vmatpush.msra.mxu0 %v440
  %460 = vmatpush.msra.mxu0 %v439
  %461 = vmatpush.msra.mxu0 %v438
  %462 = vmatpush.msra.mxu0 %v437
  %463 = vmatmul.f32.gmra.mxu0 %v442
  %v464 = vpop.f32.mrf.mxu0
  %v465 = vadd.f32 0.0, %v464
  %466 = vmatmul.f32.gmra.mxu0 %v445
  %v467 = vpop.f32.mrf.mxu0
  %v468 = vadd.f32 0.0, %v467
  %469 = vdwg.mxu0
  %v470 = vadd.f32 %v433, %v465
  %v471 = vadd.f32 %v434, %v468
  %v472 = vld [vmem:[%s397 + $0x2] sm:$0xff]
  %v473 = vld [vmem:[%s397 + $0xa] sm:$0xff]
  %v474 = vld [vmem:[%s251] sm:$0xff]
  %v475 = vld [vmem:[%s251 + $0x8] sm:$0xff]
  %v476 = vld [vmem:[%s251 + $0x10] sm:$0xff]
  %v477 = vld [vmem:[%s251 + $0x18] sm:$0xff]
  %v479 = vsel %vm35, %v472, 0
  %v482 = vsel %vm35, %v473, 0
  %484 = vmatpush.msra.mxu0 0.0
  %485 = vmatpush.msra.mxu0 0.0
  %486 = vmatpush.msra.mxu0 0.0
  %487 = vmatpush.msra.mxu0 0.0
  %488 = vmatpush.msra.mxu0 0.0
  %489 = vmatpush.msra.mxu0 0.0
  %490 = vmatpush.msra.mxu0 0.0
  %491 = vmatpush.msra.mxu0 0.0
  %492 = vmatpush.msra.mxu0 0.0
  %493 = vmatpush.msra.mxu0 0.0
  %494 = vmatpush.msra.mxu0 0.0
  %495 = vmatpush.msra.mxu0 0.0
  %496 = vmatpush.msra.mxu0 %v477
  %497 = vmatpush.msra.mxu0 %v476
  %498 = vmatpush.msra.mxu0 %v475
  %499 = vmatpush.msra.mxu0 %v474
  %500 = vmatmul.f32.gmra.mxu0 %v479
  %v501 = vpop.f32.mrf.mxu0
  %v502 = vadd.f32 0.0, %v501
  %503 = vmatmul.f32.gmra.mxu0 %v482
  %v504 = vpop.f32.mrf.mxu0
  %v505 = vadd.f32 0.0, %v504
  %506 = vdwg.mxu0
  %v507 = vadd.f32 %v470, %v502
  %v508 = vadd.f32 %v471, %v505
  %s509 = scalar_lea.vmem [#allocation4], 16
  %510 = vst [vmem:[%s509] sm:$0xff] %v507
  %511 = vst [vmem:[%s509 + $0x8] sm:$0xff] %v508
  %v512 = vld [vmem:[#allocation4] sm:$0xff]
  %v513 = vld [vmem:[#allocation4 + $0x8] sm:$0xff]
  %v514 = vld [vmem:[#allocation4 + $0x10] sm:$0xff]
  %v515 = vld [vmem:[#allocation4 + $0x18] sm:$0xff]
  %v516 = vadd.f32 %v512, %v514
  %v517 = vadd.f32 %v513, %v515
  %v518 = vadd.f32 %v516, %v517
  %v519 = vrot.slane %v518, 4
  %v520 = vadd.f32 %v518, %v519
  %v521 = vrot.slane %v520, 2
  %v522 = vadd.f32 %v520, %v521
  %v523 = vrot.slane %v522, 1
  %v524 = vadd.f32 %v522, %v523
  %v525 = vld [vmem:[%s9] sm:$0xff]
  %v526 = vld [vmem:[%s9 + $0x8] sm:$0xff]
  %v527 = vld [vmem:[%s9 + $0x10] sm:$0xff]
  %v528 = vld [vmem:[%s9 + $0x18] sm:$0xff]
  %v529 = vld [vmem:[%s9 + $0x20] sm:$0xff]
  %v530 = vld [vmem:[%s9 + $0x28] sm:$0xff]
  %v531 = vld [vmem:[%s9 + $0x30] sm:$0xff]
  %v532 = vld [vmem:[%s9 + $0x38] sm:$0xff]
  %v533 = vld [vmem:[%s9 + $0x40] sm:$0xff]
  %v534 = vld [vmem:[%s9 + $0x48] sm:$0xff]
  %v535 = vld [vmem:[%s9 + $0x50] sm:$0xff]
  %v536 = vld [vmem:[%s9 + $0x58] sm:$0xff]
  %v537 = vld [vmem:[%s9 + $0x60] sm:$0xff]
  %v538 = vld [vmem:[%s9 + $0x68] sm:$0xff]
  %v539 = vld [vmem:[%s9 + $0x70] sm:$0xff]
  %v540 = vld [vmem:[%s9 + $0x78] sm:$0xff]
  %541 = vmatpush.msra.mxu0 %v540
  %542 = vmatpush.msra.mxu0 %v539
  %543 = vmatpush.msra.mxu0 %v538
  %544 = vmatpush.msra.mxu0 %v537
  %545 = vmatpush.msra.mxu0 %v536
  %546 = vmatpush.msra.mxu0 %v535
  %547 = vmatpush.msra.mxu0 %v534
  %548 = vmatpush.msra.mxu0 %v533
  %549 = vmatpush.msra.mxu0 %v532
  %550 = vmatpush.msra.mxu0 %v531
  %551 = vmatpush.msra.mxu0 %v530
  %552 = vmatpush.msra.mxu0 %v529
  %553 = vmatpush.msra.mxu0 %v528
  %554 = vmatpush.msra.mxu0 %v527
  %555 = vmatpush.msra.mxu0 %v526
  %556 = vmatpush.msra.mxu0 %v525
  %557 = vmatmul.f32.gmra.mxu0 %v524
  %v558 = vpop.f32.mrf.mxu0
  %v559 = vadd.f32 0.0, %v558
  %560 = vdwg.mxu0
  %v561 = vmul.f32 %v559, 0.001953125
  %v562 = vperm.slane %v561, 0
  %v563 = vsub.f32 %v512, %v562
  %v564 = vsub.f32 %v513, %v562
  %v565 = vsub.f32 %v514, %v562
  %v566 = vsub.f32 %v515, %v562
  %v567 = vmul.f32 %v563, %v563
  %v568 = vmul.f32 %v564, %v564
  %v569 = vmul.f32 %v565, %v565
  %v570 = vmul.f32 %v566, %v566
  %v571 = vadd.f32 %v567, %v569
  %v572 = vadd.f32 %v568, %v570
  %v573 = vadd.f32 %v571, %v572
  %v574 = vrot.slane %v573, 4
  %v575 = vadd.f32 %v573, %v574
  %v576 = vrot.slane %v575, 2
  %v577 = vadd.f32 %v575, %v576
  %v578 = vrot.slane %v577, 1
  %v579 = vadd.f32 %v577, %v578
  %580 = vmatpush.msra.mxu0 %v540
  %581 = vmatpush.msra.mxu0 %v539
  %582 = vmatpush.msra.mxu0 %v538
  %583 = vmatpush.msra.mxu0 %v537
  %584 = vmatpush.msra.mxu0 %v536
  %585 = vmatpush.msra.mxu0 %v535
  %586 = vmatpush.msra.mxu0 %v534
  %587 = vmatpush.msra.mxu0 %v533
  %588 = vmatpush.msra.mxu0 %v532
  %589 = vmatpush.msra.mxu0 %v531
  %590 = vmatpush.msra.mxu0 %v530
  %591 = vmatpush.msra.mxu0 %v529
  %592 = vmatpush.msra.mxu0 %v528
  %593 = vmatpush.msra.mxu0 %v527
  %594 = vmatpush.msra.mxu0 %v526
  %595 = vmatpush.msra.mxu0 %v525
  %596 = vmatmul.f32.gmra.mxu0 %v579
  %v597 = vpop.f32.mrf.mxu0
  %v598 = vadd.f32 0.0, %v597
  %599 = vdwg.mxu0
  %v600 = vmul.f32 %v598, 0.001953125
  %v601 = vld [vmem:[%s5] sm:$0x1]
  %v602 = vadd.f32 %v600, 1e-05
  %v603 = vrsqrt.pop %v602
  %v604 = vmul.f32 %v603, %v602
  %v605 = vmul.f32 %v604, %v603
  %v606 = vmul.f32 0.5, %v605
  %v607 = vsub.f32 1.5, %v606
  %v608 = vmul.f32 %v603, %v607
  %vm609 = vweird.f32 %v602
  %vm610 = vweird.f32 %v603
  %vm611 = vmor %vm609, %vm610
  %v612 = vsel %vm611, %v603, %v608
  %v613 = vmul.f32 %v601, %v612
  %v615 = vperm.slane %v613, 0
  %v617 = vmul.f32 %v563, %v615
  %v618 = vmul.f32 %v564, %v615
  %v619 = vmul.f32 %v565, %v615
  %v620 = vmul.f32 %v566, %v615
  %v621 = vld [vmem:[%s6] sm:$0x1]
  %v623 = vperm.slane %v621, 0
  %v625 = vadd.f32 %v617, %v623
  %v626 = vadd.f32 %v618, %v623
  %v627 = vadd.f32 %v619, %v623
  %v628 = vadd.f32 %v620, %v623
  %v629 = vmax.f32 %v625, 0.0
  %v630 = vmax.f32 %v626, 0.0
  %v631 = vmax.f32 %v627, 0.0
  %v632 = vmax.f32 %v628, 0.0
  %633 = vst [vmem:[#allocation5] sm:$0xff] 0.0
  %634 = vst [vmem:[#allocation5 + $0x8] sm:$0xff] 0.0
  %635 = vst [vmem:[#allocation5 + $0x10] sm:$0x3] 0.0
  %636 = vst [vmem:[#allocation5 + $0x18] sm:$0xff] 0.0
  %637 = vst [vmem:[#allocation5 + $0x20] sm:$0xff] 0.0
  %638 = vst [vmem:[#allocation5 + $0x28] sm:$0x3] 0.0
  %639 = vst [vmem:[#allocation5 + $0x1] sm:$0xff] %v629
  %640 = vst [vmem:[#allocation5 + $0x9] sm:$0xff] %v630
  %641 = vst [vmem:[#allocation5 + $0x19] sm:$0xff] %v631
  %642 = vst [vmem:[#allocation5 + $0x21] sm:$0xff] %v632
  %v643 = vld [vmem:[#allocation5] sm:$0xff]
  %v644 = vld [vmem:[#allocation5 + $0x8] sm:$0xff]
  %v645 = vld [vmem:[%s4] sm:$0xff]
  %v646 = vld [vmem:[%s4 + $0x8] sm:$0xff]
  %v647 = vld [vmem:[%s4 + $0x10] sm:$0xff]
  %v648 = vld [vmem:[%s4 + $0x18] sm:$0xff]
  %v649 = vld [vmem:[%s4 + $0x20] sm:$0xff]
  %v650 = vld [vmem:[%s4 + $0x28] sm:$0xff]
  %v651 = vld [vmem:[%s4 + $0x30] sm:$0xff]
  %v652 = vld [vmem:[%s4 + $0x38] sm:$0xff]
  %v653 = vld [vmem:[%s4 + $0x40] sm:$0xff]
  %v654 = vld [vmem:[%s4 + $0x48] sm:$0xff]
  %v655 = vld [vmem:[%s4 + $0x50] sm:$0xff]
  %v656 = vld [vmem:[%s4 + $0x58] sm:$0xff]
  %v657 = vld [vmem:[%s4 + $0x60] sm:$0xff]
  %v658 = vld [vmem:[%s4 + $0x68] sm:$0xff]
  %v659 = vld [vmem:[%s4 + $0x70] sm:$0xff]
  %v660 = vld [vmem:[%s4 + $0x78] sm:$0xff]
  %v661 = vld [vmem:[#allocation5 + $0x1] sm:$0xff]
  %v662 = vld [vmem:[#allocation5 + $0x9] sm:$0xff]
  %s663 = scalar_lea.vmem %s4, 128
  %v664 = vld [vmem:[%s663] sm:$0xff]
  %v665 = vld [vmem:[%s663 + $0x8] sm:$0xff]
  %v666 = vld [vmem:[%s663 + $0x10] sm:$0xff]
  %v667 = vld [vmem:[%s663 + $0x18] sm:$0xff]
  %v668 = vld [vmem:[%s663 + $0x20] sm:$0xff]
  %v669 = vld [vmem:[%s663 + $0x28] sm:$0xff]
  %v670 = vld [vmem:[%s663 + $0x30] sm:$0xff]
  %v671 = vld [vmem:[%s663 + $0x38] sm:$0xff]
  %v672 = vld [vmem:[%s663 + $0x40] sm:$0xff]
  %v673 = vld [vmem:[%s663 + $0x48] sm:$0xff]
  %v674 = vld [vmem:[%s663 + $0x50] sm:$0xff]
  %v675 = vld [vmem:[%s663 + $0x58] sm:$0xff]
  %v676 = vld [vmem:[%s663 + $0x60] sm:$0xff]
  %v677 = vld [vmem:[%s663 + $0x68] sm:$0xff]
  %v678 = vld [vmem:[%s663 + $0x70] sm:$0xff]
  %v679 = vld [vmem:[%s663 + $0x78] sm:$0xff]
  %680 = vmatpush.msra.mxu0 %v679
  %681 = vmatpush.msra.mxu0 %v678
  %682 = vmatpush.msra.mxu0 %v677
  %683 = vmatpush.msra.mxu0 %v676
  %684 = vmatpush.msra.mxu0 %v675
  %685 = vmatpush.msra.mxu0 %v674
  %686 = vmatpush.msra.mxu0 %v673
  %687 = vmatpush.msra.mxu0 %v672
  %688 = vmatpush.msra.mxu0 %v671
  %689 = vmatpush.msra.mxu0 %v670
  %690 = vmatpush.msra.mxu0 %v669
  %691 = vmatpush.msra.mxu0 %v668
  %692 = vmatpush.msra.mxu0 %v667
  %693 = vmatpush.msra.mxu0 %v666
  %694 = vmatpush.msra.mxu0 %v665
  %695 = vmatpush.msra.mxu0 %v664
  %696 = vmatmul.f32.gmra.mxu0 %v661
  %v697 = vpop.f32.mrf.mxu0
  %v698 = vadd.f32 0.0, %v697
  %699 = vmatmul.f32.gmra.mxu0 %v662
  %v700 = vpop.f32.mrf.mxu0
  %v701 = vadd.f32 0.0, %v700
  %702 = vdwg.mxu0
  %703 = vmatpush.msra.mxu0 %v660
  %704 = vmatpush.msra.mxu0 %v659
  %705 = vmatpush.msra.mxu0 %v658
  %706 = vmatpush.msra.mxu0 %v657
  %707 = vmatpush.msra.mxu0 %v656
  %708 = vmatpush.msra.mxu0 %v655
  %709 = vmatpush.msra.mxu0 %v654
  %710 = vmatpush.msra.mxu0 %v653
  %711 = vmatpush.msra.mxu0 %v652
  %712 = vmatpush.msra.mxu0 %v651
  %713 = vmatpush.msra.mxu0 %v650
  %714 = vmatpush.msra.mxu0 %v649
  %715 = vmatpush.msra.mxu0 %v648
  %716 = vmatpush.msra.mxu0 %v647
  %717 = vmatpush.msra.mxu0 %v646
  %718 = vmatpush.msra.mxu0 %v645
  %719 = vmatmul.f32.gmra.mxu0 %v643
  %v720 = vpop.f32.mrf.mxu0
  %v721 = vadd.f32 %v698, %v720
  %722 = vmatmul.f32.gmra.mxu0 %v644
  %v723 = vpop.f32.mrf.mxu0
  %v724 = vadd.f32 %v701, %v723
  %725 = vdwg.mxu0
  %v726 = vld [vmem:[#allocation5 + $0x2] sm:$0xff]
  %v727 = vld [vmem:[#allocation5 + $0xa] sm:$0xff]
  %s728 = scalar_lea.vmem %s4, 256
  %v729 = vld [vmem:[%s728] sm:$0xff]
  %v730 = vld [vmem:[%s728 + $0x8] sm:$0xff]
  %v731 = vld [vmem:[%s728 + $0x10] sm:$0xff]
  %v732 = vld [vmem:[%s728 + $0x18] sm:$0xff]
  %v733 = vld [vmem:[%s728 + $0x20] sm:$0xff]
  %v734 = vld [vmem:[%s728 + $0x28] sm:$0xff]
  %v735 = vld [vmem:[%s728 + $0x30] sm:$0xff]
  %v736 = vld [vmem:[%s728 + $0x38] sm:$0xff]
  %v737 = vld [vmem:[%s728 + $0x40] sm:$0xff]
  %v738 = vld [vmem:[%s728 + $0x48] sm:$0xff]
  %v739 = vld [vmem:[%s728 + $0x50] sm:$0xff]
  %v740 = vld [vmem:[%s728 + $0x58] sm:$0xff]
  %v741 = vld [vmem:[%s728 + $0x60] sm:$0xff]
  %v742 = vld [vmem:[%s728 + $0x68] sm:$0xff]
  %v743 = vld [vmem:[%s728 + $0x70] sm:$0xff]
  %v744 = vld [vmem:[%s728 + $0x78] sm:$0xff]
  %745 = vmatpush.msra.mxu0 %v744
  %746 = vmatpush.msra.mxu0 %v743
  %747 = vmatpush.msra.mxu0 %v742
  %748 = vmatpush.msra.mxu0 %v741
  %749 = vmatpush.msra.mxu0 %v740
  %750 = vmatpush.msra.mxu0 %v739
  %751 = vmatpush.msra.mxu0 %v738
  %752 = vmatpush.msra.mxu0 %v737
  %753 = vmatpush.msra.mxu0 %v736
  %754 = vmatpush.msra.mxu0 %v735
  %755 = vmatpush.msra.mxu0 %v734
  %756 = vmatpush.msra.mxu0 %v733
  %757 = vmatpush.msra.mxu0 %v732
  %758 = vmatpush.msra.mxu0 %v731
  %759 = vmatpush.msra.mxu0 %v730
  %760 = vmatpush.msra.mxu0 %v729
  %761 = vmatmul.f32.gmra.mxu0 %v726
  %v762 = vpop.f32.mrf.mxu0
  %v763 = vadd.f32 0.0, %v762
  %764 = vmatmul.f32.gmra.mxu0 %v727
  %v765 = vpop.f32.mrf.mxu0
  %v766 = vadd.f32 0.0, %v765
  %767 = vdwg.mxu0
  %v768 = vadd.f32 %v721, %v763
  %v769 = vadd.f32 %v724, %v766
  %770 = vst [vmem:[#allocation4] sm:$0xff] %v768
  %771 = vst [vmem:[#allocation4 + $0x8] sm:$0xff] %v769
  %s772 = scalar_lea.vmem [#allocation5], 24
  %v773 = vld [vmem:[%s772] sm:$0xff]
  %v774 = vld [vmem:[%s772 + $0x8] sm:$0xff]
  %v775 = vld [vmem:[%s4] sm:$0xff]
  %v776 = vld [vmem:[%s4 + $0x8] sm:$0xff]
  %v777 = vld [vmem:[%s4 + $0x10] sm:$0xff]
  %v778 = vld [vmem:[%s4 + $0x18] sm:$0xff]
  %v779 = vld [vmem:[%s4 + $0x20] sm:$0xff]
  %v780 = vld [vmem:[%s4 + $0x28] sm:$0xff]
  %v781 = vld [vmem:[%s4 + $0x30] sm:$0xff]
  %v782 = vld [vmem:[%s4 + $0x38] sm:$0xff]
  %v783 = vld [vmem:[%s4 + $0x40] sm:$0xff]
  %v784 = vld [vmem:[%s4 + $0x48] sm:$0xff]
  %v785 = vld [vmem:[%s4 + $0x50] sm:$0xff]
  %v786 = vld [vmem:[%s4 + $0x58] sm:$0xff]
  %v787 = vld [vmem:[%s4 + $0x60] sm:$0xff]
  %v788 = vld [vmem:[%s4 + $0x68] sm:$0xff]
  %v789 = vld [vmem:[%s4 + $0x70] sm:$0xff]
  %v790 = vld [vmem:[%s4 + $0x78] sm:$0xff]
  %v791 = vld [vmem:[%s772 + $0x1] sm:$0xff]
  %v792 = vld [vmem:[%s772 + $0x9] sm:$0xff]
  %v793 = vld [vmem:[%s663] sm:$0xff]
  %v794 = vld [vmem:[%s663 + $0x8] sm:$0xff]
  %v795 = vld [vmem:[%s663 + $0x10] sm:$0xff]
  %v796 = vld [vmem:[%s663 + $0x18] sm:$0xff]
  %v797 = vld [vmem:[%s663 + $0x20] sm:$0xff]
  %v798 = vld [vmem:[%s663 + $0x28] sm:$0xff]
  %v799 = vld [vmem:[%s663 + $0x30] sm:$0xff]
  %v800 = vld [vmem:[%s663 + $0x38] sm:$0xff]
  %v801 = vld [vmem:[%s663 + $0x40] sm:$0xff]
  %v802 = vld [vmem:[%s663 + $0x48] sm:$0xff]
  %v803 = vld [vmem:[%s663 + $0x50] sm:$0xff]
  %v804 = vld [vmem:[%s663 + $0x58] sm:$0xff]
  %v805 = vld [vmem:[%s663 + $0x60] sm:$0xff]
  %v806 = vld [vmem:[%s663 + $0x68] sm:$0xff]
  %v807 = vld [vmem:[%s663 + $0x70] sm:$0xff]
  %v808 = vld [vmem:[%s663 + $0x78] sm:$0xff]
  %809 = vmatpush.msra.mxu0 %v808
  %810 = vmatpush.msra.mxu0 %v807
  %811 = vmatpush.msra.mxu0 %v806
  %812 = vmatpush.msra.mxu0 %v805
  %813 = vmatpush.msra.mxu0 %v804
  %814 = vmatpush.msra.mxu0 %v803
  %815 = vmatpush.msra.mxu0 %v802
  %816 = vmatpush.msra.mxu0 %v801
  %817 = vmatpush.msra.mxu0 %v800
  %818 = vmatpush.msra.mxu0 %v799
  %819 = vmatpush.msra.mxu0 %v798
  %820 = vmatpush.msra.mxu0 %v797
  %821 = vmatpush.msra.mxu0 %v796
  %822 = vmatpush.msra.mxu0 %v795
  %823 = vmatpush.msra.mxu0 %v794
  %824 = vmatpush.msra.mxu0 %v793
  %825 = vmatmul.f32.gmra.mxu0 %v791
  %v826 = vpop.f32.mrf.mxu0
  %v827 = vadd.f32 0.0, %v826
  %828 = vmatmul.f32.gmra.mxu0 %v792
  %v829 = vpop.f32.mrf.mxu0
  %v830 = vadd.f32 0.0, %v829
  %831 = vdwg.mxu0
  %832 = vmatpush.msra.mxu0 %v790
  %833 = vmatpush.msra.mxu0 %v789
  %834 = vmatpush.msra.mxu0 %v788
  %835 = vmatpush.msra.mxu0 %v787
  %836 = vmatpush.msra.mxu0 %v786
  %837 = vmatpush.msra.mxu0 %v785
  %838 = vmatpush.msra.mxu0 %v784
  %839 = vmatpush.msra.mxu0 %v783
  %840 = vmatpush.msra.mxu0 %v782
  %841 = vmatpush.msra.mxu0 %v781
  %842 = vmatpush.msra.mxu0 %v780
  %843 = vmatpush.msra.mxu0 %v779
  %844 = vmatpush.msra.mxu0 %v778
  %845 = vmatpush.msra.mxu0 %v777
  %846 = vmatpush.msra.mxu0 %v776
  %847 = vmatpush.msra.mxu0 %v775
  %848 = vmatmul.f32.gmra.mxu0 %v773
  %v849 = vpop.f32.mrf.mxu0
  %v850 = vadd.f32 %v827, %v849
  %851 = vmatmul.f32.gmra.mxu0 %v774
  %v852 = vpop.f32.mrf.mxu0
  %v853 = vadd.f32 %v830, %v852
  %854 = vdwg.mxu0
  %v855 = vld [vmem:[%s772 + $0x2] sm:$0xff]
  %v856 = vld [vmem:[%s772 + $0xa] sm:$0xff]
  %v857 = vld [vmem:[%s728] sm:$0xff]
  %v858 = vld [vmem:[%s728 + $0x8] sm:$0xff]
  %v859 = vld [vmem:[%s728 + $0x10] sm:$0xff]
  %v860 = vld [vmem:[%s728 + $0x18] sm:$0xff]
  %v861 = vld [vmem:[%s728 + $0x20] sm:$0xff]
  %v862 = vld [vmem:[%s728 + $0x28] sm:$0xff]
  %v863 = vld [vmem:[%s728 + $0x30] sm:$0xff]
  %v864 = vld [vmem:[%s728 + $0x38] sm:$0xff]
  %v865 = vld [vmem:[%s728 + $0x40] sm:$0xff]
  %v866 = vld [vmem:[%s728 + $0x48] sm:$0xff]
  %v867 = vld [vmem:[%s728 + $0x50] sm:$0xff]
  %v868 = vld [vmem:[%s728 + $0x58] sm:$0xff]
  %v869 = vld [vmem:[%s728 + $0x60] sm:$0xff]
  %v870 = vld [vmem:[%s728 + $0x68] sm:$0xff]
  %v871 = vld [vmem:[%s728 + $0x70] sm:$0xff]
  %v872 = vld [vmem:[%s728 + $0x78] sm:$0xff]
  %873 = vmatpush.msra.mxu0 %v872
  %874 = vmatpush.msra.mxu0 %v871
  %875 = vmatpush.msra.mxu0 %v870
  %876 = vmatpush.msra.mxu0 %v869
  %877 = vmatpush.msra.mxu0 %v868
  %878 = vmatpush.msra.mxu0 %v867
  %879 = vmatpush.msra.mxu0 %v866
  %880 = vmatpush.msra.mxu0 %v865
  %881 = vmatpush.msra.mxu0 %v864
  %882 = vmatpush.msra.mxu0 %v863
  %883 = vmatpush.msra.mxu0 %v862
  %884 = vmatpush.msra.mxu0 %v861
  %885 = vmatpush.msra.mxu0 %v860
  %886 = vmatpush.msra.mxu0 %v859
  %887 = vmatpush.msra.mxu0 %v858
  %888 = vmatpush.msra.mxu0 %v857
  %889 = vmatmul.f32.gmra.mxu0 %v855
  %v890 = vpop.f32.mrf.mxu0
  %v891 = vadd.f32 0.0, %v890
  %892 = vmatmul.f32.gmra.mxu0 %v856
  %v893 = vpop.f32.mrf.mxu0
  %v894 = vadd.f32 0.0, %v893
  %895 = vdwg.mxu0
  %v896 = vadd.f32 %v850, %v891
  %v897 = vadd.f32 %v853, %v894
  %898 = vst [vmem:[%s509] sm:$0xff] %v896
  %899 = vst [vmem:[%s509 + $0x8] sm:$0xff] %v897
  %v900 = vld [vmem:[#allocation4] sm:$0xff]
  %v901 = vld [vmem:[#allocation4 + $0x8] sm:$0xff]
  %v902 = vld [vmem:[#allocation4 + $0x10] sm:$0xff]
  %v903 = vld [vmem:[#allocation4 + $0x18] sm:$0xff]
  %v904 = vadd.f32 %v900, %v902
  %v905 = vadd.f32 %v901, %v903
  %v906 = vadd.f32 %v904, %v905
  %v907 = vrot.slane %v906, 4
  %v908 = vadd.f32 %v906, %v907
  %v909 = vrot.slane %v908, 2
  %v910 = vadd.f32 %v908, %v909
  %v911 = vrot.slane %v910, 1
  %v912 = vadd.f32 %v910, %v911
  %v913 = vld [vmem:[%s9] sm:$0xff]
  %v914 = vld [vmem:[%s9 + $0x8] sm:$0xff]
  %v915 = vld [vmem:[%s9 + $0x10] sm:$0xff]
  %v916 = vld [vmem:[%s9 + $0x18] sm:$0xff]
  %v917 = vld [vmem:[%s9 + $0x20] sm:$0xff]
  %v918 = vld [vmem:[%s9 + $0x28] sm:$0xff]
  %v919 = vld [vmem:[%s9 + $0x30] sm:$0xff]
  %v920 = vld [vmem:[%s9 + $0x38] sm:$0xff]
  %v921 = vld [vmem:[%s9 + $0x40] sm:$0xff]
  %v922 = vld [vmem:[%s9 + $0x48] sm:$0xff]
  %v923 = vld [vmem:[%s9 + $0x50] sm:$0xff]
  %v924 = vld [vmem:[%s9 + $0x58] sm:$0xff]
  %v925 = vld [vmem:[%s9 + $0x60] sm:$0xff]
  %v926 = vld [vmem:[%s9 + $0x68] sm:$0xff]
  %v927 = vld [vmem:[%s9 + $0x70] sm:$0xff]
  %v928 = vld [vmem:[%s9 + $0x78] sm:$0xff]
  %929 = vmatpush.msra.mxu0 %v928
  %930 = vmatpush.msra.mxu0 %v927
  %931 = vmatpush.msra.mxu0 %v926
  %932 = vmatpush.msra.mxu0 %v925
  %933 = vmatpush.msra.mxu0 %v924
  %934 = vmatpush.msra.mxu0 %v923
  %935 = vmatpush.msra.mxu0 %v922
  %936 = vmatpush.msra.mxu0 %v921
  %937 = vmatpush.msra.mxu0 %v920
  %938 = vmatpush.msra.mxu0 %v919
  %939 = vmatpush.msra.mxu0 %v918
  %940 = vmatpush.msra.mxu0 %v917
  %941 = vmatpush.msra.mxu0 %v916
  %942 = vmatpush.msra.mxu0 %v915
  %943 = vmatpush.msra.mxu0 %v914
  %944 = vmatpush.msra.mxu0 %v913
  %945 = vmatmul.f32.gmra.mxu0 %v912
  %v946 = vpop.f32.mrf.mxu0
  %v947 = vadd.f32 0.0, %v946
  %948 = vdwg.mxu0
  %v949 = vmul.f32 %v947, 0.001953125
  %v950 = vperm.slane %v949, 0
  %v951 = vsub.f32 %v900, %v950
  %v952 = vsub.f32 %v901, %v950
  %v953 = vsub.f32 %v902, %v950
  %v954 = vsub.f32 %v903, %v950
  %v955 = vmul.f32 %v951, %v951
  %v956 = vmul.f32 %v952, %v952
  %v957 = vmul.f32 %v953, %v953
  %v958 = vmul.f32 %v954, %v954
  %v959 = vadd.f32 %v955, %v957
  %v960 = vadd.f32 %v956, %v958
  %v961 = vadd.f32 %v959, %v960
  %v962 = vrot.slane %v961, 4
  %v963 = vadd.f32 %v961, %v962
  %v964 = vrot.slane %v963, 2
  %v965 = vadd.f32 %v963, %v964
  %v966 = vrot.slane %v965, 1
  %v967 = vadd.f32 %v965, %v966
  %968 = vmatpush.msra.mxu0 %v928
  %969 = vmatpush.msra.mxu0 %v927
  %970 = vmatpush.msra.mxu0 %v926
  %971 = vmatpush.msra.mxu0 %v925
  %972 = vmatpush.msra.mxu0 %v924
  %973 = vmatpush.msra.mxu0 %v923
  %974 = vmatpush.msra.mxu0 %v922
  %975 = vmatpush.msra.mxu0 %v921
  %976 = vmatpush.msra.mxu0 %v920
  %977 = vmatpush.msra.mxu0 %v919
  %978 = vmatpush.msra.mxu0 %v918
  %979 = vmatpush.msra.mxu0 %v917
  %980 = vmatpush.msra.mxu0 %v916
  %981 = vmatpush.msra.mxu0 %v915
  %982 = vmatpush.msra.mxu0 %v914
  %983 = vmatpush.msra.mxu0 %v913
  %984 = vmatmul.f32.gmra.mxu0 %v967
  %v985 = vpop.f32.mrf.mxu0
  %v986 = vadd.f32 0.0, %v985
  %987 = vdwg.mxu0
  %v988 = vmul.f32 %v986, 0.001953125
  %v989 = vld [vmem:[%s7] sm:$0x1]
  %v990 = vadd.f32 %v988, 1e-05
  %v991 = vrsqrt.pop %v990
  %v992 = vmul.f32 %v991, %v990
  %v993 = vmul.f32 %v992, %v991
  %v994 = vmul.f32 0.5, %v993
  %v995 = vsub.f32 1.5, %v994
  %v996 = vmul.f32 %v991, %v995
  %vm997 = vweird.f32 %v990
  %vm998 = vweird.f32 %v991
  %vm999 = vmor %vm997, %vm998
  %v1000 = vsel %vm999, %v991, %v996
  %v1001 = vmul.f32 %v989, %v1000
  %v1003 = vperm.slane %v1001, 0
  %v1005 = vmul.f32 %v951, %v1003
  %v1006 = vmul.f32 %v952, %v1003
  %v1007 = vmul.f32 %v953, %v1003
  %v1008 = vmul.f32 %v954, %v1003
  %v1009 = vld [vmem:[%s8] sm:$0x1]
  %v1011 = vperm.slane %v1009, 0
  %v1013 = vadd.f32 %v1005, %v1011
  %v1014 = vadd.f32 %v1006, %v1011
  %v1015 = vadd.f32 %v1007, %v1011
  %v1016 = vadd.f32 %v1008, %v1011
  %v1017 = vmax.f32 %v1013, 0.0
  %v1018 = vmax.f32 %v1014, 0.0
  %v1019 = vmax.f32 %v1015, 0.0
  %v1020 = vmax.f32 %v1016, 0.0
  %1021 = vst [vmem:[%s10] sm:$0xff] %v1017
  %1022 = vst [vmem:[%s10 + $0x8] sm:$0xff] %v1018
  %1023 = vst [vmem:[%s10 + $0x10] sm:$0xff] %v1019
  %1024 = vst [vmem:[%s10 + $0x18] sm:$0xff] %v1020
  // Predicated region
  $region42: #{up_forward.3} parent=0 // pred_check
    _
  $region43: #{up_forward.3} parent=0 // pred_check_branch
    %1026 = sbr.rel (0) target = $region45
  $region44: #{up_forward.3} parent=0 // pred_region
    _
  $region45: #{up_forward.3} parent=0 // pred_fallthru
    _
  // Predicated region
  $region46: #{up_forward.3} parent=0 // pred_check
    _
  $region47: #{up_forward.3} parent=0 // pred_check_branch
    %1028 = sbr.rel (0) target = $region49
  $region48: #{up_forward.3} parent=0 // pred_region
    _
  $region49: #{up_forward.3} parent=0 // pred_fallthru
    _

</llo_original>
